<compile_context>
chip_gen: v6e
topology: v6e:2x2x1
jax: 0.10.0
libtpu: 0.0.40
codegen_flags: <defaults>
</compile_context>

<pallas_src>
import functools

import numpy as np

import jax
import jax.numpy as jnp
from jax.experimental import pallas as pl
from jax.experimental.pallas import tpu as pltpu

EPS = 1e-5


def _residual_block_kernel(x_ref, band1_ref, g1_ref, be1_ref,
                           band2_ref, g2_ref, be2_ref, proj_ref,
                           o_ref, *, count):
    """Fused residual block in lane-dense (N, HS, L) layout, L = P*W*C."""
    N, HS, L = x_ref.shape
    M = N * HS
    inv_count = 1.0 / count

    x = x_ref[...].reshape(M, L)                 # f32 residual / conv input
    proj = proj_ref[...]                         # (L, L) f32 channel projector

    # Per-image row-boundary masks for the output-side super-row shifts.
    row_in_img = jax.lax.broadcasted_iota(jnp.int32, (M, L), 0) % HS
    from_above_ok = row_in_img != 0              # a row above exists in-image
    from_below_ok = row_in_img != HS - 1         # a row below exists in-image

    def conv3x3(a_flat, band_ref):
        # One fused bf16 MXU matmul against [B_-1 | B_0 | B_+1] (L, 3L); f32 acc.
        y3 = jnp.dot(a_flat.astype(jnp.bfloat16), band_ref[...],
                     preferred_element_type=jnp.float32)           # (M, 3L)
        y_m1 = y3[:, :L]            # a[r] @ B_-1 : consumed by output row r+1
        y_0 = y3[:, L:2 * L]        # a[r] @ B_0  : consumed by output row r
        y_p1 = y3[:, 2 * L:]        # a[r] @ B_+1 : consumed by output row r-1
        # Output-side super-row shifts: XLU rolls + boundary masks. No shifted
        # input copies, no unaligned interior stores.
        from_above = jnp.where(from_above_ok,
                               pltpu.roll(y_m1, shift=1, axis=0), 0.0)
        from_below = jnp.where(from_below_ok,
                               pltpu.roll(y_p1, shift=M - 1, axis=0), 0.0)
        # Conv bias intentionally dropped: it cancels exactly under
        # training-mode BatchNorm (batch statistics).
        return y_0 + from_above + from_below                       # (M, L)

    def batchnorm(y, g_ref, be_ref):
        # One pass for both moments; both stats pushed through a single
        # channel-projection matmul (kept f32: tiny and precision-critical).
        stats = jnp.concatenate(
            [jnp.sum(y, axis=0, keepdims=True),
             jnp.sum(y * y, axis=0, keepdims=True)], axis=0)       # (2, L)
        stats_l = jnp.dot(stats, proj, preferred_element_type=jnp.float32)
        mean_l = stats_l[0:1, :] * inv_count
        var_l = stats_l[1:2, :] * inv_count - mean_l * mean_l
        scale_l = g_ref[...] * jax.lax.rsqrt(var_l + EPS)          # (1, L)
        shift_l = be_ref[...] - mean_l * scale_l                   # (1, L)
        return y * scale_l + shift_l                               # (M, L)

    h = jnp.maximum(batchnorm(conv3x3(x, band1_ref), g1_ref, be1_ref), 0.0)
    out = batchnorm(conv3x3(h, band2_ref), g2_ref, be2_ref)
    o_ref[...] = (out + x).reshape(N, HS, L).astype(o_ref.dtype)


def _mxu_lane_align():
    """256 on v6e/v7x (MXU tile width); 128 on v5e and earlier generations."""
    try:
        kind = jax.devices()[0].device_kind.lower()
    except Exception:
        return 256
    if any(t in kind for t in ("v2", "v3", "v4", "v5")):
        return 128
    return 256


def _pick_row_pack(H, W, C, prefer):
    """Pack P image rows per super-row so the lane axis P*W*C is a multiple of
    `prefer` (MXU tile width), falling back to 128; capped at 1024 lanes."""
    wc = W * C
    aligns = (prefer,) if prefer == 128 else (prefer, 128)
    for align in aligns:
        if wc % align == 0:
            return 1
        for p in range(1, min(H, 16) + 1):
            if H % p == 0 and (p * wc) % align == 0 and p * wc <= 1024:
                return p
    return 1


def _band_matrices_cat(w_hwio, W, C, P):
    """Concatenated banded conv matrices [B_{-1} | B_0 | B_{+1}] of shape (L, 3L).

    B_dr[(hi*W + wi)*C + cin, (ho*W + wo)*C + cout] = w[kh, kw, cin, cout]
    with hi = ho + kh - 1 - dr*P and wi = wo + kw - 1 (taps falling off the
    super-row / image edge contribute zero, i.e. padding='SAME').
    """
    L = P * W * C
    w = np.asarray(w_hwio, dtype=np.float32)
    bands = []
    for dr in (-1, 0, 1):
        B = np.zeros((L, L), np.float32)
        for kh in range(3):
            s_row = kh - 1 - dr * P
            if abs(s_row) > P - 1:
                continue
            Sp = np.eye(P, k=-s_row, dtype=np.float32)
            for kw in range(3):
                Sw = np.eye(W, k=-(kw - 1), dtype=np.float32)
                B += np.kron(Sp, np.kron(Sw, w[kh, kw]))
        bands.append(B)
    # bf16 MXU operands (f32 dots are emulated on all generations); the kernel
    # accumulates in f32.
    return jnp.asarray(np.concatenate(bands, axis=1), dtype=jnp.bfloat16)


def prepare_params(params, H, W):
    """Precompute lane-dense weights/BN tables for residual_block_forward.

    Hoisted out of the per-call jit path (host-side numpy) so the O(L^2) band
    construction is paid once per weight set and can be cached by the caller.
    """
    w1, b1, g1, be1, w2, b2, g2, be2 = params
    del b1, b2          # conv biases cancel exactly under training-mode BN
    C = int(w1.shape[2])
    P = _pick_row_pack(H, W, C, prefer=_mxu_lane_align())
    L = P * W * C

    # Weight residency guard: two bf16 band stacks (L x 3L) + one f32 projector.
    weight_bytes = 2 * (L * 3 * L * 2) + L * L * 4
    if weight_bytes > 24 * 1024 * 1024:
        # TODO(synk): at realistic channel counts switch to (M, C)@(C, C)
        # channel-mixing matmuls with the W-direction taps done via pltpu.roll
        # on the lane axis (weights shrink to 9*C^2); the O(L^2) banded form
        # exceeds v7x's 64 MiB VMEM and inflates FLOPs by ~P*W/3.
        raise NotImplementedError(
            f"banded weights need {weight_bytes / 2**20:.1f} MiB of VMEM; "
            "restructure to CxC channel-mixing matmuls for this size")

    band1 = _band_matrices_cat(w1, W, C, P)
    band2 = _band_matrices_cat(w2, W, C, P)
    proj = jnp.asarray(np.tile(np.eye(C, dtype=np.float32), (P * W, P * W)))

    def tile_l(v):
        return jnp.asarray(np.tile(np.asarray(v, np.float32), (1, P * W)))

    return (band1, tile_l(g1), tile_l(be1), band2, tile_l(g2), tile_l(be2), proj)


@jax.jit
def residual_block_forward(x_nchw, prepared):
    """x_nchw: (N, C, H, W) float32 -> (N, C, H, W) float32 (training-mode BN)."""
    band1, g1_l, be1_l, band2, g2_l, be2_l, proj = prepared
    N, C, H, W = x_nchw.shape
    L = band1.shape[0]
    P = L // (W * C)
    HS = H // P

    # NCHW -> lane-dense (N, H/P, P*W*C).
    # TODO(synk): accept NHWC / lane-dense I/O at realistic shapes so these two
    # relayout passes (extra HBM round trips) fold into producer/consumer ops.
    x_lane = jnp.transpose(x_nchw, (0, 2, 3, 1)).reshape(N, HS, L)

    kernel = functools.partial(_residual_block_kernel, count=float(N * H * W))

    out_lane = pl.pallas_call(
        kernel,
        out_shape=jax.ShapeDtypeStruct((N, HS, L), jnp.float32),
        in_specs=[pl.BlockSpec(memory_space=pltpu.MemorySpace.VMEM)] * 8,
        out_specs=pl.BlockSpec(memory_space=pltpu.MemorySpace.VMEM),
        # Far above actual use (<2 MiB), safe on every generation. When scaling
        # tiles up: raise toward ~100 MiB on v5e/v6e, keep <= ~48-56 MiB on v7x.
        compiler_params=pltpu.CompilerParams(vmem_limit_bytes=32 * 1024 * 1024),
    )(x_lane, band1, g1_l, be1_l, band2, g2_l, be2_l, proj)

    return jnp.transpose(out_lane.reshape(N, H, W, C), (0, 3, 1, 2))


def _reference_forward(x_nchw, params):
    """Pure-JAX reference (conv WITH bias + training-mode BN), f32 HIGHEST precision."""
    w1, b1, g1, be1, w2, b2, g2, be2 = params
    x = jnp.transpose(x_nchw, (0, 2, 3, 1))

    def conv(h, w, b):
        y = jax.lax.conv_general_dilated(
            h, w, window_strides=(1, 1), padding='SAME',
            dimension_numbers=('NHWC', 'HWIO', 'NHWC'),
            precision=jax.lax.Precision.HIGHEST)
        return y + b

    def bn(h, g, be):
        m = jnp.mean(h, axis=(0, 1, 2), keepdims=True)
        v = jnp.mean((h - m) ** 2, axis=(0, 1, 2), keepdims=True)
        return g * (h - m) / jnp.sqrt(v + EPS) + be

    h = jnp.maximum(bn(conv(x, w1, b1), g1, be1), 0.0)
    out = bn(conv(h, w2, b2), g2, be2) + x
    return jnp.transpose(out, (0, 3, 1, 2))


def init_params(key, channels):
    """Deterministic synthetic parameters (shapes follow nn.Conv2d/BatchNorm2d)."""
    k1, k2, k3, k4 = jax.random.split(key, 4)
    fan_in = channels * 3 * 3
    bound = 1.0 / jnp.sqrt(fan_in)
    # Conv weights stored HWIO: (3, 3, Cin, Cout).
    w1 = jax.random.uniform(k1, (3, 3, channels, channels), jnp.float32, -bound, bound)
    b1 = jax.random.uniform(k2, (1, channels), jnp.float32, -bound, bound)
    w2 = jax.random.uniform(k3, (3, 3, channels, channels), jnp.float32, -bound, bound)
    b2 = jax.random.uniform(k4, (1, channels), jnp.float32, -bound, bound)
    # BatchNorm2d default init: gamma=1, beta=0.
    g1 = jnp.ones((1, channels), jnp.float32)
    be1 = jnp.zeros((1, channels), jnp.float32)
    g2 = jnp.ones((1, channels), jnp.float32)
    be2 = jnp.zeros((1, channels), jnp.float32)
    return (w1, b1, g1, be1, w2, b2, g2, be2)


if __name__ == "__main__":
    key = jax.random.PRNGKey(0)
    kx, kp = jax.random.split(key)

    N, C, H, W = 2, 4, 16, 16
    x = jax.random.normal(kx, (N, C, H, W), jnp.float32)
    params = init_params(kp, C)

    prepared = prepare_params(params, H, W)       # once per weight set (cacheable)
    out = jax.block_until_ready(residual_block_forward(x, prepared))

    ref = _reference_forward(x, params)
    assert out.shape == (N, C, H, W)
    # bf16 MXU operands (f32 accumulation, f32 BN stats): tolerance sized for
    # bf16 operand rounding (~2^-9 relative), well above the observed error.
    assert jnp.allclose(out, ref, atol=3e-2, rtol=1e-2), "mismatch vs. reference"

    print("KERNEL_OK")
</pallas_src>

<mosaic_0001>
module attributes {stable_mosaic.version = 11 : i64} {
  func.func @_residual_block_kernel(%arg0: memref<2x4x256xf32, #tpu.memory_space<vmem>>, %arg1: memref<256x768xbf16, #tpu.memory_space<vmem>>, %arg2: memref<1x256xf32, #tpu.memory_space<vmem>>, %arg3: memref<1x256xf32, #tpu.memory_space<vmem>>, %arg4: memref<256x768xbf16, #tpu.memory_space<vmem>>, %arg5: memref<1x256xf32, #tpu.memory_space<vmem>>, %arg6: memref<1x256xf32, #tpu.memory_space<vmem>>, %arg7: memref<256x256xf32, #tpu.memory_space<vmem>>, %arg8: memref<2x4x256xf32, #tpu.memory_space<vmem>>) attributes {dimension_semantics = [], scalar_prefetch = 0 : i64, scratch_operands = 0 : i64, tpu.core_type = #tpu.core_type<tc>} {
    %c0 = arith.constant 0 : index
    %c0_0 = arith.constant 0 : index
    %c0_1 = arith.constant 0 : index
    %0 = vector.load %arg0[%c0, %c0_0, %c0_1] : memref<2x4x256xf32, #tpu.memory_space<vmem>>, vector<2x4x256xf32>
    %1 = vector.shape_cast %0 : vector<2x4x256xf32> to vector<8x256xf32>
    %c0_2 = arith.constant 0 : index
    %c0_3 = arith.constant 0 : index
    %2 = vector.load %arg7[%c0_2, %c0_3] : memref<256x256xf32, #tpu.memory_space<vmem>>, vector<256x256xf32>
    %3 = tpu.iota {dimensions = array<i32: 0>} : vector<8x256xi32>
    %c4_i32 = arith.constant 4 : i32
    %c0_i32 = arith.constant 0 : i32
    %4 = arith.cmpi eq, %c4_i32, %c0_i32 : i32
    %c1_i32 = arith.constant 1 : i32
    %5 = arith.select %4, %c1_i32, %c4_i32 : i32
    %6 = vector.broadcast %5 : i32 to vector<8x256xi32>
    %7 = arith.remsi %3, %6 : vector<8x256xi32>
    %c0_i32_4 = arith.constant 0 : i32
    %8 = vector.broadcast %c0_i32_4 : i32 to vector<8x256xi32>
    %9 = arith.cmpi ne, %7, %8 : vector<8x256xi32>
    %c0_i32_5 = arith.constant 0 : i32
    %10 = vector.broadcast %c0_i32_5 : i32 to vector<8x256xi32>
    %11 = arith.cmpi slt, %7, %10 : vector<8x256xi32>
    %c0_i32_6 = arith.constant 0 : i32
    %12 = arith.cmpi slt, %5, %c0_i32_6 : i32
    %13 = vector.broadcast %12 : i1 to vector<8x256xi1>
    %14 = vector.broadcast %13 : vector<8x256xi1> to vector<8x256xi1>
    %15 = arith.xori %11, %14 : vector<8x256xi1>
    %16 = arith.andi %15, %9 : vector<8x256xi1>
    %17 = vector.broadcast %5 : i32 to vector<8x256xi32>
    %18 = arith.addi %7, %17 : vector<8x256xi32>
    %19 = arith.select %16, %18, %7 : vector<8x256xi1>, vector<8x256xi32>
    %c0_i32_7 = arith.constant 0 : i32
    %20 = vector.broadcast %c0_i32_7 : i32 to vector<8x256xi32>
    %21 = arith.cmpi ne, %19, %20 : vector<8x256xi32>
    %c3_i32 = arith.constant 3 : i32
    %22 = vector.broadcast %c3_i32 : i32 to vector<8x256xi32>
    %23 = arith.cmpi ne, %19, %22 : vector<8x256xi32>
    %24 = arith.truncf %1 : vector<8x256xf32> to vector<8x256xbf16>
    %c0_8 = arith.constant 0 : index
    %c0_9 = arith.constant 0 : index
    %25 = vector.load %arg1[%c0_8, %c0_9] : memref<256x768xbf16, #tpu.memory_space<vmem>>, vector<256x768xbf16>
    %cst = arith.constant dense<0.000000e+00> : vector<8x768xf32>
    %26 = tpu.matmul %24, %25, %cst {dimension_numbers = #tpu.dot_dimension_numbers<[1], [0], [0], [1], [0, 0, 1, 1], [], []>} : vector<8x256xbf16>, vector<256x768xbf16>, vector<8x768xf32> -> vector<8x768xf32>
    %27 = vector.extract_strided_slice %26 {offsets = [0, 0], sizes = [8, 256], strides = [1, 1]} : vector<8x768xf32> to vector<8x256xf32>
    %28 = vector.extract_strided_slice %26 {offsets = [0, 256], sizes = [8, 256], strides = [1, 1]} : vector<8x768xf32> to vector<8x256xf32>
    %29 = vector.extract_strided_slice %26 {offsets = [0, 512], sizes = [8, 256], strides = [1, 1]} : vector<8x768xf32> to vector<8x256xf32>
    %c1_i32_10 = arith.constant 1 : i32
    %30 = tpu.dynamic_rotate %27 by %c1_i32_10 dim 0 : vector<8x256xf32>, i32 -> vector<8x256xf32>
    %cst_11 = arith.constant 0.000000e+00 : f32
    %31 = vector.broadcast %cst_11 : f32 to vector<8x256xf32>
    %32 = arith.select %21, %30, %31 : vector<8x256xi1>, vector<8x256xf32>
    %c7_i32 = arith.constant 7 : i32
    %33 = tpu.dynamic_rotate %29 by %c7_i32 dim 0 : vector<8x256xf32>, i32 -> vector<8x256xf32>
    %cst_12 = arith.constant 0.000000e+00 : f32
    %34 = vector.broadcast %cst_12 : f32 to vector<8x256xf32>
    %35 = arith.select %23, %33, %34 : vector<8x256xi1>, vector<8x256xf32>
    %36 = arith.addf %28, %32 : vector<8x256xf32>
    %37 = arith.addf %36, %35 : vector<8x256xf32>
    %cst_13 = arith.constant dense<0.000000e+00> : vector<256xf32>
    %38 = vector.multi_reduction <add>, %37, %cst_13 [0] : vector<8x256xf32> to vector<256xf32>
    %39 = vector.shape_cast %38 : vector<256xf32> to vector<1x256xf32>
    %40 = arith.mulf %37, %37 : vector<8x256xf32>
    %cst_14 = arith.constant dense<0.000000e+00> : vector<256xf32>
    %41 = vector.multi_reduction <add>, %40, %cst_14 [0] : vector<8x256xf32> to vector<256xf32>
    %42 = vector.shape_cast %41 : vector<256xf32> to vector<1x256xf32>
    %43 = tpu.concatenate %39, %42 in 0 : vector<1x256xf32>, vector<1x256xf32> -> vector<2x256xf32>
    %cst_15 = arith.constant dense<0.000000e+00> : vector<2x256xf32>
    %44 = tpu.matmul %43, %2, %cst_15 {dimension_numbers = #tpu.dot_dimension_numbers<[1], [0], [0], [1], [0, 0, 1, 1], [], []>} : vector<2x256xf32>, vector<256x256xf32>, vector<2x256xf32> -> vector<2x256xf32>
    %45 = vector.extract_strided_slice %44 {offsets = [0, 0], sizes = [1, 256], strides = [1, 1]} : vector<2x256xf32> to vector<1x256xf32>
    %cst_16 = arith.constant 0.001953125 : f32
    %46 = vector.broadcast %cst_16 : f32 to vector<1x256xf32>
    %47 = arith.mulf %45, %46 : vector<1x256xf32>
    %48 = vector.extract_strided_slice %44 {offsets = [1, 0], sizes = [1, 256], strides = [1, 1]} : vector<2x256xf32> to vector<1x256xf32>
    %cst_17 = arith.constant 0.001953125 : f32
    %49 = vector.broadcast %cst_17 : f32 to vector<1x256xf32>
    %50 = arith.mulf %48, %49 : vector<1x256xf32>
    %51 = arith.mulf %47, %47 : vector<1x256xf32>
    %52 = arith.subf %50, %51 : vector<1x256xf32>
    %c0_18 = arith.constant 0 : index
    %c0_19 = arith.constant 0 : index
    %53 = vector.load %arg2[%c0_18, %c0_19] : memref<1x256xf32, #tpu.memory_space<vmem>>, vector<1x256xf32>
    %cst_20 = arith.constant 9.99999974E-6 : f32
    %54 = vector.broadcast %cst_20 : f32 to vector<1x256xf32>
    %55 = arith.addf %52, %54 : vector<1x256xf32>
    %56 = math.rsqrt %55 : vector<1x256xf32>
    %57 = arith.mulf %53, %56 : vector<1x256xf32>
    %c0_21 = arith.constant 0 : index
    %c0_22 = arith.constant 0 : index
    %58 = vector.load %arg3[%c0_21, %c0_22] : memref<1x256xf32, #tpu.memory_space<vmem>>, vector<1x256xf32>
    %59 = arith.mulf %47, %57 : vector<1x256xf32>
    %60 = arith.subf %58, %59 : vector<1x256xf32>
    %61 = vector.broadcast %57 : vector<1x256xf32> to vector<8x256xf32>
    %62 = arith.mulf %37, %61 : vector<8x256xf32>
    %63 = vector.broadcast %60 : vector<1x256xf32> to vector<8x256xf32>
    %64 = arith.addf %62, %63 : vector<8x256xf32>
    %cst_23 = arith.constant 0.000000e+00 : f32
    %65 = vector.broadcast %cst_23 : f32 to vector<8x256xf32>
    %66 = arith.maximumf %64, %65 : vector<8x256xf32>
    %67 = arith.truncf %66 : vector<8x256xf32> to vector<8x256xbf16>
    %c0_24 = arith.constant 0 : index
    %c0_25 = arith.constant 0 : index
    %68 = vector.load %arg4[%c0_24, %c0_25] : memref<256x768xbf16, #tpu.memory_space<vmem>>, vector<256x768xbf16>
    %cst_26 = arith.constant dense<0.000000e+00> : vector<8x768xf32>
    %69 = tpu.matmul %67, %68, %cst_26 {dimension_numbers = #tpu.dot_dimension_numbers<[1], [0], [0], [1], [0, 0, 1, 1], [], []>} : vector<8x256xbf16>, vector<256x768xbf16>, vector<8x768xf32> -> vector<8x768xf32>
    %70 = vector.extract_strided_slice %69 {offsets = [0, 0], sizes = [8, 256], strides = [1, 1]} : vector<8x768xf32> to vector<8x256xf32>
    %71 = vector.extract_strided_slice %69 {offsets = [0, 256], sizes = [8, 256], strides = [1, 1]} : vector<8x768xf32> to vector<8x256xf32>
    %72 = vector.extract_strided_slice %69 {offsets = [0, 512], sizes = [8, 256], strides = [1, 1]} : vector<8x768xf32> to vector<8x256xf32>
    %c1_i32_27 = arith.constant 1 : i32
    %73 = tpu.dynamic_rotate %70 by %c1_i32_27 dim 0 : vector<8x256xf32>, i32 -> vector<8x256xf32>
    %cst_28 = arith.constant 0.000000e+00 : f32
    %74 = vector.broadcast %cst_28 : f32 to vector<8x256xf32>
    %75 = arith.select %21, %73, %74 : vector<8x256xi1>, vector<8x256xf32>
    %c7_i32_29 = arith.constant 7 : i32
    %76 = tpu.dynamic_rotate %72 by %c7_i32_29 dim 0 : vector<8x256xf32>, i32 -> vector<8x256xf32>
    %cst_30 = arith.constant 0.000000e+00 : f32
    %77 = vector.broadcast %cst_30 : f32 to vector<8x256xf32>
    %78 = arith.select %23, %76, %77 : vector<8x256xi1>, vector<8x256xf32>
    %79 = arith.addf %71, %75 : vector<8x256xf32>
    %80 = arith.addf %79, %78 : vector<8x256xf32>
    %cst_31 = arith.constant dense<0.000000e+00> : vector<256xf32>
    %81 = vector.multi_reduction <add>, %80, %cst_31 [0] : vector<8x256xf32> to vector<256xf32>
    %82 = vector.shape_cast %81 : vector<256xf32> to vector<1x256xf32>
    %83 = arith.mulf %80, %80 : vector<8x256xf32>
    %cst_32 = arith.constant dense<0.000000e+00> : vector<256xf32>
    %84 = vector.multi_reduction <add>, %83, %cst_32 [0] : vector<8x256xf32> to vector<256xf32>
    %85 = vector.shape_cast %84 : vector<256xf32> to vector<1x256xf32>
    %86 = tpu.concatenate %82, %85 in 0 : vector<1x256xf32>, vector<1x256xf32> -> vector<2x256xf32>
    %cst_33 = arith.constant dense<0.000000e+00> : vector<2x256xf32>
    %87 = tpu.matmul %86, %2, %cst_33 {dimension_numbers = #tpu.dot_dimension_numbers<[1], [0], [0], [1], [0, 0, 1, 1], [], []>} : vector<2x256xf32>, vector<256x256xf32>, vector<2x256xf32> -> vector<2x256xf32>
    %88 = vector.extract_strided_slice %87 {offsets = [0, 0], sizes = [1, 256], strides = [1, 1]} : vector<2x256xf32> to vector<1x256xf32>
    %cst_34 = arith.constant 0.001953125 : f32
    %89 = vector.broadcast %cst_34 : f32 to vector<1x256xf32>
    %90 = arith.mulf %88, %89 : vector<1x256xf32>
    %91 = vector.extract_strided_slice %87 {offsets = [1, 0], sizes = [1, 256], strides = [1, 1]} : vector<2x256xf32> to vector<1x256xf32>
    %cst_35 = arith.constant 0.001953125 : f32
    %92 = vector.broadcast %cst_35 : f32 to vector<1x256xf32>
    %93 = arith.mulf %91, %92 : vector<1x256xf32>
    %94 = arith.mulf %90, %90 : vector<1x256xf32>
    %95 = arith.subf %93, %94 : vector<1x256xf32>
    %c0_36 = arith.constant 0 : index
    %c0_37 = arith.constant 0 : index
    %96 = vector.load %arg5[%c0_36, %c0_37] : memref<1x256xf32, #tpu.memory_space<vmem>>, vector<1x256xf32>
    %cst_38 = arith.constant 9.99999974E-6 : f32
    %97 = vector.broadcast %cst_38 : f32 to vector<1x256xf32>
    %98 = arith.addf %95, %97 : vector<1x256xf32>
    %99 = math.rsqrt %98 : vector<1x256xf32>
    %100 = arith.mulf %96, %99 : vector<1x256xf32>
    %c0_39 = arith.constant 0 : index
    %c0_40 = arith.constant 0 : index
    %101 = vector.load %arg6[%c0_39, %c0_40] : memref<1x256xf32, #tpu.memory_space<vmem>>, vector<1x256xf32>
    %102 = arith.mulf %90, %100 : vector<1x256xf32>
    %103 = arith.subf %101, %102 : vector<1x256xf32>
    %104 = vector.broadcast %100 : vector<1x256xf32> to vector<8x256xf32>
    %105 = arith.mulf %80, %104 : vector<8x256xf32>
    %106 = vector.broadcast %103 : vector<1x256xf32> to vector<8x256xf32>
    %107 = arith.addf %105, %106 : vector<8x256xf32>
    %108 = arith.addf %107, %1 : vector<8x256xf32>
    %109 = vector.shape_cast %108 : vector<8x256xf32> to vector<2x4x256xf32>
    %c0_41 = arith.constant 0 : index
    %c0_42 = arith.constant 0 : index
    %c0_43 = arith.constant 0 : index
    %110 = vector.load %arg8[%c0_41, %c0_42, %c0_43] : memref<2x4x256xf32, #tpu.memory_space<vmem>>, vector<2x4x256xf32>
    tpu.vector_store %arg8[%c0_41, %c0_42, %c0_43], %109 {strides = array<i32>} : memref<2x4x256xf32, #tpu.memory_space<vmem>>, vector<2x4x256xf32>,
    return
  }
}

</mosaic_0001>

<llo_original>
// kernel: residual_block_forward.1
$region0: #{residual_block_forward.1}
  #allocation0 [shape = 'u32[]', space=smem, size = 0x4, offset = 0x4, fixed_abs, tag = 'smem constant byte address 0x4 - core index']
  #allocation1 [shape = 'u32[144,128]{1,0:T(1,128)}', space=vmem, size = 0x12000, scoped, tag = 'internal scratch']
  %s0 = inlined_call_operand.vmem [shape: f32[2,4,256], index: 0, kind: input, shape index: {}]
  %s1 = inlined_call_operand.vmem [shape: bf16[256,768], index: 1, kind: input, shape index: {}]
  %s2 = inlined_call_operand.vmem [shape: f32[1,256], index: 2, kind: input, shape index: {}]
  %s3 = inlined_call_operand.vmem [shape: f32[1,256], index: 3, kind: input, shape index: {}]
  %s4 = inlined_call_operand.hbm [shape: bf16[256,768], index: 4, kind: input, shape index: {}]
  %s5 = inlined_call_operand.vmem [shape: f32[1,256], index: 5, kind: input, shape index: {}]
  %s6 = inlined_call_operand.vmem [shape: f32[1,256], index: 6, kind: input, shape index: {}]
  %s7 = inlined_call_operand.hbm [shape: f32[256,256], index: 7, kind: input, shape index: {}]
  %s8 = inlined_call_operand.vmem [shape: f32[2,4,256], index: 8, kind: output, shape index: {}]
  %s9 = sld [smem:[#allocation0]]
  $region50: #{residual_block_forward.1} parent=0
    _
  %s11 = ssub.s32 1, %s9
  %s12 = scalar_select 0, %s11, %s9
  $region1: #{residual_block_forward.1} parent=0
    #allocation2 [shape = 'u8[393216]{0}', space=vmem, size = 0x60000, scoped, tag = 'input window, operand 4, single buffered']
    #allocation3 [shape = 's32[1]{0}', space=sflag, size = 0x4, scoped, tag = 'scoped memory for residual_block_forward.1']
    #allocation4 [shape = 'u8[262144]{0}', space=vmem, size = 0x40000, scoped, tag = 'input window, operand 7, single buffered']
    #allocation5 [shape = 's32[1]{0}', space=sflag, size = 0x4, scoped, tag = 'scoped memory for residual_block_forward.1']
    %13 = vsyncpa [#allocation3], 0
    %14 = vsyncpa [#allocation5], 0
    // Predicated region
    $region2: #{residual_block_forward.1} parent=1 // pred_check
      _
    $region3: #{residual_block_forward.1} parent=1 // pred_check_branch
      %16 = sbr.rel (0) target = $region5
    $region4: #{residual_block_forward.1} parent=1 // pred_region
      _
    $region5: #{residual_block_forward.1} parent=1 // pred_fallthru
      _
    // Predicated region
    $region6: #{residual_block_forward.1} parent=1 // pred_check
      _
    $region7: #{residual_block_forward.1} parent=1 // pred_check_branch
      %18 = sbr.rel (0) target = $region9
    $region8: #{residual_block_forward.1} parent=1 // pred_region
      _
    $region9: #{residual_block_forward.1} parent=1 // pred_fallthru
      _
    // Predicated region
    $region10: #{residual_block_forward.1} parent=1 // pred_check
      _
    $region11: #{residual_block_forward.1} parent=1 // pred_check_branch
      %20 = sbr.rel (0) target = $region13
    $region12: #{residual_block_forward.1} parent=1 // pred_region
      _
    $region13: #{residual_block_forward.1} parent=1 // pred_fallthru
      _
    // Predicated region
    $region14: #{residual_block_forward.1} parent=1 // pred_check
      _
    $region15: #{residual_block_forward.1} parent=1 // pred_check_branch
      %22 = sbr.rel (0) target = $region17
    $region16: #{residual_block_forward.1} parent=1 // pred_region
      _
    $region17: #{residual_block_forward.1} parent=1 // pred_fallthru
      _
    // Predicated region
    $region18: #{residual_block_forward.1} parent=1 // pred_check
      _
    $region19: #{residual_block_forward.1} parent=1 // pred_check_branch
      %24 = sbr.rel (0) target = $region21
    $region20: #{residual_block_forward.1} parent=1 // pred_region
      %s26 = ssub.s32 12288, 12288
      %27 = vsyncadd [#allocation3], %s26
      %s28 = sshll.u32 [#allocation2], 4
      %s29 = int_to_ptr.vmem [resolvable:$true] %s28
      %34 = dma.hbm_to_vmem [thread:$0]  %s4, 12288, %s29, [#allocation3], 384, 384, 24
    $region21: #{residual_block_forward.1} parent=1 // pred_fallthru
      _
    // Predicated region
    $region22: #{residual_block_forward.1} parent=1 // pred_check
      _
    $region23: #{residual_block_forward.1} parent=1 // pred_check_branch
      %36 = sbr.rel (0) target = $region25
    $region24: #{residual_block_forward.1} parent=1 // pred_region
      _
    $region25: #{residual_block_forward.1} parent=1 // pred_fallthru
      _
    // Predicated region
    $region26: #{residual_block_forward.1} parent=1 // pred_check
      _
    $region27: #{residual_block_forward.1} parent=1 // pred_check_branch
      %38 = sbr.rel (0) target = $region29
    $region28: #{residual_block_forward.1} parent=1 // pred_region
      _
    $region29: #{residual_block_forward.1} parent=1 // pred_fallthru
      _
    // Predicated region
    $region30: #{residual_block_forward.1} parent=1 // pred_check
      _
    $region31: #{residual_block_forward.1} parent=1 // pred_check_branch
      %40 = sbr.rel (0) target = $region33
    $region32: #{residual_block_forward.1} parent=1 // pred_region
      %s42 = ssub.s32 8192, 8192
      %43 = vsyncadd [#allocation5], %s42
      %s44 = sshll.u32 [#allocation4], 4
      %s45 = int_to_ptr.vmem [resolvable:$true] %s44
      %50 = dma.hbm_to_vmem [thread:$0]  %s7, 8192, %s45, [#allocation5], 256, 256, 16
    $region33: #{residual_block_forward.1} parent=1 // pred_fallthru
      _
    // Predicated region
    $region34: #{residual_block_forward.1} parent=1 // pred_check
      _
    $region35: #{residual_block_forward.1} parent=1 // pred_check_branch
      %52 = sbr.rel (0) target = $region37
    $region36: #{residual_block_forward.1} parent=1 // pred_region
      %53 = dma.done [#allocation3], 12288
    $region37: #{residual_block_forward.1} parent=1 // pred_fallthru
      _
    // Predicated region
    $region38: #{residual_block_forward.1} parent=1 // pred_check
      _
    $region39: #{residual_block_forward.1} parent=1 // pred_check_branch
      %55 = sbr.rel (0) target = $region41
    $region40: #{residual_block_forward.1} parent=1 // pred_region
      %56 = dma.done [#allocation5], 8192
    $region41: #{residual_block_forward.1} parent=1 // pred_fallthru
      _
    %v57 = vld [vmem:[%s0] sm:$0xff]
    %v58 = vld [vmem:[%s0 + $0x8] sm:$0xff]
    %v59 = vld [vmem:[#allocation4] sm:$0xff]
    %v60 = vld [vmem:[#allocation4 + $0x8] sm:$0xff]
    %v61 = vld [vmem:[#allocation4 + $0x10] sm:$0xff]
    %v62 = vld [vmem:[#allocation4 + $0x18] sm:$0xff]
    %v63 = vld [vmem:[#allocation4 + $0x20] sm:$0xff]
    %v64 = vld [vmem:[#allocation4 + $0x28] sm:$0xff]
    %v65 = vld [vmem:[#allocation4 + $0x30] sm:$0xff]
    %v66 = vld [vmem:[#allocation4 + $0x38] sm:$0xff]
    %v67 = vld [vmem:[#allocation4 + $0x40] sm:$0xff]
    %v68 = vld [vmem:[#allocation4 + $0x48] sm:$0xff]
    %v69 = vld [vmem:[#allocation4 + $0x50] sm:$0xff]
    %v70 = vld [vmem:[#allocation4 + $0x58] sm:$0xff]
    %v71 = vld [vmem:[#allocation4 + $0x60] sm:$0xff]
    %v72 = vld [vmem:[#allocation4 + $0x68] sm:$0xff]
    %v73 = vld [vmem:[#allocation4 + $0x70] sm:$0xff]
    %v74 = vld [vmem:[#allocation4 + $0x78] sm:$0xff]
    %v75 = vld [vmem:[#allocation4 + $0x80] sm:$0xff]
    %v76 = vld [vmem:[#allocation4 + $0x88] sm:$0xff]
    %v77 = vld [vmem:[#allocation4 + $0x90] sm:$0xff]
    %v78 = vld [vmem:[#allocation4 + $0x98] sm:$0xff]
    %v79 = vld [vmem:[#allocation4 + $0xa0] sm:$0xff]
    %v80 = vld [vmem:[#allocation4 + $0xa8] sm:$0xff]
    %v81 = vld [vmem:[#allocation4 + $0xb0] sm:$0xff]
    %v82 = vld [vmem:[#allocation4 + $0xb8] sm:$0xff]
    %v83 = vld [vmem:[#allocation4 + $0xc0] sm:$0xff]
    %v84 = vld [vmem:[#allocation4 + $0xc8] sm:$0xff]
    %v85 = vld [vmem:[#allocation4 + $0xd0] sm:$0xff]
    %v86 = vld [vmem:[#allocation4 + $0xd8] sm:$0xff]
    %v87 = vld [vmem:[#allocation4 + $0xe0] sm:$0xff]
    %v88 = vld [vmem:[#allocation4 + $0xe8] sm:$0xff]
    %v89 = vld [vmem:[#allocation4 + $0xf0] sm:$0xff]
    %v90 = vld [vmem:[#allocation4 + $0xf8] sm:$0xff]
    %v91 = vld [vmem:[#allocation4 + $0x100] sm:$0xff]
    %v92 = vld [vmem:[#allocation4 + $0x108] sm:$0xff]
    %v93 = vld [vmem:[#allocation4 + $0x110] sm:$0xff]
    %v94 = vld [vmem:[#allocation4 + $0x118] sm:$0xff]
    %v95 = vld [vmem:[#allocation4 + $0x120] sm:$0xff]
    %v96 = vld [vmem:[#allocation4 + $0x128] sm:$0xff]
    %v97 = vld [vmem:[#allocation4 + $0x130] sm:$0xff]
    %v98 = vld [vmem:[#allocation4 + $0x138] sm:$0xff]
    %v99 = vld [vmem:[#allocation4 + $0x140] sm:$0xff]
    %v100 = vld [vmem:[#allocation4 + $0x148] sm:$0xff]
    %v101 = vld [vmem:[#allocation4 + $0x150] sm:$0xff]
    %v102 = vld [vmem:[#allocation4 + $0x158] sm:$0xff]
    %v103 = vld [vmem:[#allocation4 + $0x160] sm:$0xff]
    %v104 = vld [vmem:[#allocation4 + $0x168] sm:$0xff]
    %v105 = vld [vmem:[#allocation4 + $0x170] sm:$0xff]
    %v106 = vld [vmem:[#allocation4 + $0x178] sm:$0xff]
    %v107 = vld [vmem:[#allocation4 + $0x180] sm:$0xff]
    %v108 = vld [vmem:[#allocation4 + $0x188] sm:$0xff]
    %v109 = vld [vmem:[#allocation4 + $0x190] sm:$0xff]
    %v110 = vld [vmem:[#allocation4 + $0x198] sm:$0xff]
    %v111 = vld [vmem:[#allocation4 + $0x1a0] sm:$0xff]
    %v112 = vld [vmem:[#allocation4 + $0x1a8] sm:$0xff]
    %v113 = vld [vmem:[#allocation4 + $0x1b0] sm:$0xff]
    %v114 = vld [vmem:[#allocation4 + $0x1b8] sm:$0xff]
    %v115 = vld [vmem:[#allocation4 + $0x1c0] sm:$0xff]
    %v116 = vld [vmem:[#allocation4 + $0x1c8] sm:$0xff]
    %v117 = vld [vmem:[#allocation4 + $0x1d0] sm:$0xff]
    %v118 = vld [vmem:[#allocation4 + $0x1d8] sm:$0xff]
    %v119 = vld [vmem:[#allocation4 + $0x1e0] sm:$0xff]
    %v120 = vld [vmem:[#allocation4 + $0x1e8] sm:$0xff]
    %v121 = vld [vmem:[#allocation4 + $0x1f0] sm:$0xff]
    %v122 = vld [vmem:[#allocation4 + $0x1f8] sm:$0xff]
    %v123 = vlaneseq
    %v124 = vshrl.u32 %v123, 7
    %vm125 = vcmp.lt.s32.totalorder %v124, 0
    %v126 = vsub.s32 0, %v124
    %v127 = vsel %vm125, %v126, %v124
    %v128 = vshrl.u32 %v127, 2
    %v129 = vand.u32 %v127, 3
    %v130 = vsub.s32 0, %v129
    %v131 = vsel %vm125, %v130, %v129
    %vm132 = vcmp.ne.s32.totalorder %v131, 0
    %vm133 = vcmp.lt.s32.totalorder %v131, 0
    %vm134 = vmand %vm133, %vm132
    %v135 = vadd.s32 %v131, 4
    %v136 = vsel %vm134, %v135, %v131
    %vm137 = vcmp.ne.s32.totalorder %v136, 0
    %vm138 = vcmp.ne.s32.totalorder %v136, 3
    %v141 = vcombine.low %v57, %v58
    %v142 = vcombine.high %v57, %v58
    %v145 = vpack.c.bf16 %v141, %v141
    %v146 = vpack.c.bf16 %v142, %v142
    %v147 = vld [vmem:[%s1] sm:$0xff]
    %v148 = vld [vmem:[%s1 + $0x8] sm:$0xff]
    %v149 = vld [vmem:[%s1 + $0x10] sm:$0xff]
    %v150 = vld [vmem:[%s1 + $0x18] sm:$0xff]
    %v151 = vld [vmem:[%s1 + $0x20] sm:$0xff]
    %v152 = vld [vmem:[%s1 + $0x28] sm:$0xff]
    %v153 = vld [vmem:[%s1 + $0x30] sm:$0xff]
    %v154 = vld [vmem:[%s1 + $0x38] sm:$0xff]
    %v155 = vld [vmem:[%s1 + $0x40] sm:$0xff]
    %v156 = vld [vmem:[%s1 + $0x48] sm:$0xff]
    %v157 = vld [vmem:[%s1 + $0x50] sm:$0xff]
    %v158 = vld [vmem:[%s1 + $0x58] sm:$0xff]
    %v159 = vld [vmem:[%s1 + $0x60] sm:$0xff]
    %v160 = vld [vmem:[%s1 + $0x68] sm:$0xff]
    %v161 = vld [vmem:[%s1 + $0x70] sm:$0xff]
    %v162 = vld [vmem:[%s1 + $0x78] sm:$0xff]
    %v163 = vld [vmem:[%s1 + $0x80] sm:$0xff]
    %v164 = vld [vmem:[%s1 + $0x88] sm:$0xff]
    %v165 = vld [vmem:[%s1 + $0x90] sm:$0xff]
    %v166 = vld [vmem:[%s1 + $0x98] sm:$0xff]
    %v167 = vld [vmem:[%s1 + $0xa0] sm:$0xff]
    %v168 = vld [vmem:[%s1 + $0xa8] sm:$0xff]
    %v169 = vld [vmem:[%s1 + $0xb0] sm:$0xff]
    %v170 = vld [vmem:[%s1 + $0xb8] sm:$0xff]
    %v171 = vld [vmem:[%s1 + $0xc0] sm:$0xff]
    %v172 = vld [vmem:[%s1 + $0xc8] sm:$0xff]
    %v173 = vld [vmem:[%s1 + $0xd0] sm:$0xff]
    %v174 = vld [vmem:[%s1 + $0xd8] sm:$0xff]
    %v175 = vld [vmem:[%s1 + $0xe0] sm:$0xff]
    %v176 = vld [vmem:[%s1 + $0xe8] sm:$0xff]
    %v177 = vld [vmem:[%s1 + $0xf0] sm:$0xff]
    %v178 = vld [vmem:[%s1 + $0xf8] sm:$0xff]
    %v179 = vld [vmem:[%s1 + $0x100] sm:$0xff]
    %v180 = vld [vmem:[%s1 + $0x108] sm:$0xff]
    %v181 = vld [vmem:[%s1 + $0x110] sm:$0xff]
    %v182 = vld [vmem:[%s1 + $0x118] sm:$0xff]
    %v183 = vld [vmem:[%s1 + $0x120] sm:$0xff]
    %v184 = vld [vmem:[%s1 + $0x128] sm:$0xff]
    %v185 = vld [vmem:[%s1 + $0x130] sm:$0xff]
    %v186 = vld [vmem:[%s1 + $0x138] sm:$0xff]
    %v187 = vld [vmem:[%s1 + $0x140] sm:$0xff]
    %v188 = vld [vmem:[%s1 + $0x148] sm:$0xff]
    %v189 = vld [vmem:[%s1 + $0x150] sm:$0xff]
    %v190 = vld [vmem:[%s1 + $0x158] sm:$0xff]
    %v191 = vld [vmem:[%s1 + $0x160] sm:$0xff]
    %v192 = vld [vmem:[%s1 + $0x168] sm:$0xff]
    %v193 = vld [vmem:[%s1 + $0x170] sm:$0xff]
    %v194 = vld [vmem:[%s1 + $0x178] sm:$0xff]
    %v195 = vld [vmem:[%s1 + $0x180] sm:$0xff]
    %v196 = vld [vmem:[%s1 + $0x188] sm:$0xff]
    %v197 = vld [vmem:[%s1 + $0x190] sm:$0xff]
    %v198 = vld [vmem:[%s1 + $0x198] sm:$0xff]
    %v199 = vld [vmem:[%s1 + $0x1a0] sm:$0xff]
    %v200 = vld [vmem:[%s1 + $0x1a8] sm:$0xff]
    %v201 = vld [vmem:[%s1 + $0x1b0] sm:$0xff]
    %v202 = vld [vmem:[%s1 + $0x1b8] sm:$0xff]
    %v203 = vld [vmem:[%s1 + $0x1c0] sm:$0xff]
    %v204 = vld [vmem:[%s1 + $0x1c8] sm:$0xff]
    %v205 = vld [vmem:[%s1 + $0x1d0] sm:$0xff]
    %v206 = vld [vmem:[%s1 + $0x1d8] sm:$0xff]
    %v207 = vld [vmem:[%s1 + $0x1e0] sm:$0xff]
    %v208 = vld [vmem:[%s1 + $0x1e8] sm:$0xff]
    %v209 = vld [vmem:[%s1 + $0x1f0] sm:$0xff]
    %v210 = vld [vmem:[%s1 + $0x1f8] sm:$0xff]
    %v211 = vld [vmem:[%s1 + $0x200] sm:$0xff]
    %v212 = vld [vmem:[%s1 + $0x208] sm:$0xff]
    %v213 = vld [vmem:[%s1 + $0x210] sm:$0xff]
    %v214 = vld [vmem:[%s1 + $0x218] sm:$0xff]
    %v215 = vld [vmem:[%s1 + $0x220] sm:$0xff]
    %v216 = vld [vmem:[%s1 + $0x228] sm:$0xff]
    %v217 = vld [vmem:[%s1 + $0x230] sm:$0xff]
    %v218 = vld [vmem:[%s1 + $0x238] sm:$0xff]
    %v219 = vld [vmem:[%s1 + $0x240] sm:$0xff]
    %v220 = vld [vmem:[%s1 + $0x248] sm:$0xff]
    %v221 = vld [vmem:[%s1 + $0x250] sm:$0xff]
    %v222 = vld [vmem:[%s1 + $0x258] sm:$0xff]
    %v223 = vld [vmem:[%s1 + $0x260] sm:$0xff]
    %v224 = vld [vmem:[%s1 + $0x268] sm:$0xff]
    %v225 = vld [vmem:[%s1 + $0x270] sm:$0xff]
    %v226 = vld [vmem:[%s1 + $0x278] sm:$0xff]
    %v227 = vld [vmem:[%s1 + $0x280] sm:$0xff]
    %v228 = vld [vmem:[%s1 + $0x288] sm:$0xff]
    %v229 = vld [vmem:[%s1 + $0x290] sm:$0xff]
    %v230 = vld [vmem:[%s1 + $0x298] sm:$0xff]
    %v231 = vld [vmem:[%s1 + $0x2a0] sm:$0xff]
    %v232 = vld [vmem:[%s1 + $0x2a8] sm:$0xff]
    %v233 = vld [vmem:[%s1 + $0x2b0] sm:$0xff]
    %v234 = vld [vmem:[%s1 + $0x2b8] sm:$0xff]
    %v235 = vld [vmem:[%s1 + $0x2c0] sm:$0xff]
    %v236 = vld [vmem:[%s1 + $0x2c8] sm:$0xff]
    %v237 = vld [vmem:[%s1 + $0x2d0] sm:$0xff]
    %v238 = vld [vmem:[%s1 + $0x2d8] sm:$0xff]
    %v239 = vld [vmem:[%s1 + $0x2e0] sm:$0xff]
    %v240 = vld [vmem:[%s1 + $0x2e8] sm:$0xff]
    %v241 = vld [vmem:[%s1 + $0x2f0] sm:$0xff]
    %v242 = vld [vmem:[%s1 + $0x2f8] sm:$0xff]
    %v339 = vunpack.c.l.b16 %v147
    %v340 = vunpack.c.h.b16 %v147
    %v341 = vunpack.c.l.b16 %v148
    %v342 = vunpack.c.h.b16 %v148
    %v343 = vunpack.c.l.b16 %v149
    %v344 = vunpack.c.h.b16 %v149
    %v345 = vunpack.c.l.b16 %v150
    %v346 = vunpack.c.h.b16 %v150
    %v347 = vunpack.c.l.b16 %v151
    %v348 = vunpack.c.h.b16 %v151
    %v349 = vunpack.c.l.b16 %v152
    %v350 = vunpack.c.h.b16 %v152
    %v351 = vunpack.c.l.b16 %v153
    %v352 = vunpack.c.h.b16 %v153
    %v353 = vunpack.c.l.b16 %v154
    %v354 = vunpack.c.h.b16 %v154
    %v355 = vunpack.c.l.b16 %v155
    %v356 = vunpack.c.h.b16 %v155
    %v357 = vunpack.c.l.b16 %v156
    %v358 = vunpack.c.h.b16 %v156
    %v359 = vunpack.c.l.b16 %v157
    %v360 = vunpack.c.h.b16 %v157
    %v361 = vunpack.c.l.b16 %v158
    %v362 = vunpack.c.h.b16 %v158
    %v363 = vunpack.c.l.b16 %v159
    %v364 = vunpack.c.h.b16 %v159
    %v365 = vunpack.c.l.b16 %v160
    %v366 = vunpack.c.h.b16 %v160
    %v367 = vunpack.c.l.b16 %v161
    %v368 = vunpack.c.h.b16 %v161
    %v369 = vunpack.c.l.b16 %v162
    %v370 = vunpack.c.h.b16 %v162
    %v371 = vunpack.c.l.b16 %v163
    %v372 = vunpack.c.h.b16 %v163
    %v373 = vunpack.c.l.b16 %v164
    %v374 = vunpack.c.h.b16 %v164
    %v375 = vunpack.c.l.b16 %v165
    %v376 = vunpack.c.h.b16 %v165
    %v377 = vunpack.c.l.b16 %v166
    %v378 = vunpack.c.h.b16 %v166
    %v379 = vunpack.c.l.b16 %v167
    %v380 = vunpack.c.h.b16 %v167
    %v381 = vunpack.c.l.b16 %v168
    %v382 = vunpack.c.h.b16 %v168
    %v383 = vunpack.c.l.b16 %v169
    %v384 = vunpack.c.h.b16 %v169
    %v385 = vunpack.c.l.b16 %v170
    %v386 = vunpack.c.h.b16 %v170
    %v387 = vunpack.c.l.b16 %v171
    %v388 = vunpack.c.h.b16 %v171
    %v389 = vunpack.c.l.b16 %v172
    %v390 = vunpack.c.h.b16 %v172
    %v391 = vunpack.c.l.b16 %v173
    %v392 = vunpack.c.h.b16 %v173
    %v393 = vunpack.c.l.b16 %v174
    %v394 = vunpack.c.h.b16 %v174
    %v395 = vunpack.c.l.b16 %v175
    %v396 = vunpack.c.h.b16 %v175
    %v397 = vunpack.c.l.b16 %v176
    %v398 = vunpack.c.h.b16 %v176
    %v399 = vunpack.c.l.b16 %v177
    %v400 = vunpack.c.h.b16 %v177
    %v401 = vunpack.c.l.b16 %v178
    %v402 = vunpack.c.h.b16 %v178
    %v403 = vunpack.c.l.b16 %v179
    %v404 = vunpack.c.h.b16 %v179
    %v405 = vunpack.c.l.b16 %v180
    %v406 = vunpack.c.h.b16 %v180
    %v407 = vunpack.c.l.b16 %v181
    %v408 = vunpack.c.h.b16 %v181
    %v409 = vunpack.c.l.b16 %v182
    %v410 = vunpack.c.h.b16 %v182
    %v411 = vunpack.c.l.b16 %v183
    %v412 = vunpack.c.h.b16 %v183
    %v413 = vunpack.c.l.b16 %v184
    %v414 = vunpack.c.h.b16 %v184
    %v415 = vunpack.c.l.b16 %v185
    %v416 = vunpack.c.h.b16 %v185
    %v417 = vunpack.c.l.b16 %v186
    %v418 = vunpack.c.h.b16 %v186
    %v419 = vunpack.c.l.b16 %v187
    %v420 = vunpack.c.h.b16 %v187
    %v421 = vunpack.c.l.b16 %v188
    %v422 = vunpack.c.h.b16 %v188
    %v423 = vunpack.c.l.b16 %v189
    %v424 = vunpack.c.h.b16 %v189
    %v425 = vunpack.c.l.b16 %v190
    %v426 = vunpack.c.h.b16 %v190
    %v427 = vunpack.c.l.b16 %v191
    %v428 = vunpack.c.h.b16 %v191
    %v429 = vunpack.c.l.b16 %v192
    %v430 = vunpack.c.h.b16 %v192
    %v431 = vunpack.c.l.b16 %v193
    %v432 = vunpack.c.h.b16 %v193
    %v433 = vunpack.c.l.b16 %v194
    %v434 = vunpack.c.h.b16 %v194
    %v435 = vunpack.c.l.b16 %v195
    %v436 = vunpack.c.h.b16 %v195
    %v437 = vunpack.c.l.b16 %v196
    %v438 = vunpack.c.h.b16 %v196
    %v439 = vunpack.c.l.b16 %v197
    %v440 = vunpack.c.h.b16 %v197
    %v441 = vunpack.c.l.b16 %v198
    %v442 = vunpack.c.h.b16 %v198
    %v443 = vunpack.c.l.b16 %v199
    %v444 = vunpack.c.h.b16 %v199
    %v445 = vunpack.c.l.b16 %v200
    %v446 = vunpack.c.h.b16 %v200
    %v447 = vunpack.c.l.b16 %v201
    %v448 = vunpack.c.h.b16 %v201
    %v449 = vunpack.c.l.b16 %v202
    %v450 = vunpack.c.h.b16 %v202
    %v451 = vunpack.c.l.b16 %v203
    %v452 = vunpack.c.h.b16 %v203
    %v453 = vunpack.c.l.b16 %v204
    %v454 = vunpack.c.h.b16 %v204
    %v455 = vunpack.c.l.b16 %v205
    %v456 = vunpack.c.h.b16 %v205
    %v457 = vunpack.c.l.b16 %v206
    %v458 = vunpack.c.h.b16 %v206
    %v459 = vunpack.c.l.b16 %v207
    %v460 = vunpack.c.h.b16 %v207
    %v461 = vunpack.c.l.b16 %v208
    %v462 = vunpack.c.h.b16 %v208
    %v463 = vunpack.c.l.b16 %v209
    %v464 = vunpack.c.h.b16 %v209
    %v465 = vunpack.c.l.b16 %v210
    %v466 = vunpack.c.h.b16 %v210
    %v467 = vunpack.c.l.b16 %v211
    %v468 = vunpack.c.h.b16 %v211
    %v469 = vunpack.c.l.b16 %v212
    %v470 = vunpack.c.h.b16 %v212
    %v471 = vunpack.c.l.b16 %v213
    %v472 = vunpack.c.h.b16 %v213
    %v473 = vunpack.c.l.b16 %v214
    %v474 = vunpack.c.h.b16 %v214
    %v475 = vunpack.c.l.b16 %v215
    %v476 = vunpack.c.h.b16 %v215
    %v477 = vunpack.c.l.b16 %v216
    %v478 = vunpack.c.h.b16 %v216
    %v479 = vunpack.c.l.b16 %v217
    %v480 = vunpack.c.h.b16 %v217
    %v481 = vunpack.c.l.b16 %v218
    %v482 = vunpack.c.h.b16 %v218
    %v483 = vunpack.c.l.b16 %v219
    %v484 = vunpack.c.h.b16 %v219
    %v485 = vunpack.c.l.b16 %v220
    %v486 = vunpack.c.h.b16 %v220
    %v487 = vunpack.c.l.b16 %v221
    %v488 = vunpack.c.h.b16 %v221
    %v489 = vunpack.c.l.b16 %v222
    %v490 = vunpack.c.h.b16 %v222
    %v491 = vunpack.c.l.b16 %v223
    %v492 = vunpack.c.h.b16 %v223
    %v493 = vunpack.c.l.b16 %v224
    %v494 = vunpack.c.h.b16 %v224
    %v495 = vunpack.c.l.b16 %v225
    %v496 = vunpack.c.h.b16 %v225
    %v497 = vunpack.c.l.b16 %v226
    %v498 = vunpack.c.h.b16 %v226
    %v499 = vunpack.c.l.b16 %v227
    %v500 = vunpack.c.h.b16 %v227
    %v501 = vunpack.c.l.b16 %v228
    %v502 = vunpack.c.h.b16 %v228
    %v503 = vunpack.c.l.b16 %v229
    %v504 = vunpack.c.h.b16 %v229
    %v505 = vunpack.c.l.b16 %v230
    %v506 = vunpack.c.h.b16 %v230
    %v507 = vunpack.c.l.b16 %v231
    %v508 = vunpack.c.h.b16 %v231
    %v509 = vunpack.c.l.b16 %v232
    %v510 = vunpack.c.h.b16 %v232
    %v511 = vunpack.c.l.b16 %v233
    %v512 = vunpack.c.h.b16 %v233
    %v513 = vunpack.c.l.b16 %v234
    %v514 = vunpack.c.h.b16 %v234
    %v515 = vunpack.c.l.b16 %v235
    %v516 = vunpack.c.h.b16 %v235
    %v517 = vunpack.c.l.b16 %v236
    %v518 = vunpack.c.h.b16 %v236
    %v519 = vunpack.c.l.b16 %v237
    %v520 = vunpack.c.h.b16 %v237
    %v521 = vunpack.c.l.b16 %v238
    %v522 = vunpack.c.h.b16 %v238
    %v523 = vunpack.c.l.b16 %v239
    %v524 = vunpack.c.h.b16 %v239
    %v525 = vunpack.c.l.b16 %v240
    %v526 = vunpack.c.h.b16 %v240
    %v527 = vunpack.c.l.b16 %v241
    %v528 = vunpack.c.h.b16 %v241
    %v529 = vunpack.c.l.b16 %v242
    %v530 = vunpack.c.h.b16 %v242
    %v531 = vpack.c.b16 %v345, %v339
    %v532 = vpack.c.b16 %v346, %v340
    %v533 = vpack.c.b16 %v347, %v341
    %v534 = vpack.c.b16 %v348, %v342
    %v535 = vpack.c.b16 %v349, %v343
    %v536 = vpack.c.b16 %v350, %v344
    %v537 = vpack.c.b16 %v357, %v351
    %v538 = vpack.c.b16 %v358, %v352
    %v539 = vpack.c.b16 %v359, %v353
    %v540 = vpack.c.b16 %v360, %v354
    %v541 = vpack.c.b16 %v361, %v355
    %v542 = vpack.c.b16 %v362, %v356
    %v543 = vpack.c.b16 %v369, %v363
    %v544 = vpack.c.b16 %v370, %v364
    %v545 = vpack.c.b16 %v371, %v365
    %v546 = vpack.c.b16 %v372, %v366
    %v547 = vpack.c.b16 %v373, %v367
    %v548 = vpack.c.b16 %v374, %v368
    %v549 = vpack.c.b16 %v381, %v375
    %v550 = vpack.c.b16 %v382, %v376
    %v551 = vpack.c.b16 %v383, %v377
    %v552 = vpack.c.b16 %v384, %v378
    %v553 = vpack.c.b16 %v385, %v379
    %v554 = vpack.c.b16 %v386, %v380
    %v555 = vpack.c.b16 %v393, %v387
    %v556 = vpack.c.b16 %v394, %v388
    %v557 = vpack.c.b16 %v395, %v389
    %v558 = vpack.c.b16 %v396, %v390
    %v559 = vpack.c.b16 %v397, %v391
    %v560 = vpack.c.b16 %v398, %v392
    %v561 = vpack.c.b16 %v405, %v399
    %v562 = vpack.c.b16 %v406, %v400
    %v563 = vpack.c.b16 %v407, %v401
    %v564 = vpack.c.b16 %v408, %v402
    %v565 = vpack.c.b16 %v409, %v403
    %v566 = vpack.c.b16 %v410, %v404
    %v567 = vpack.c.b16 %v417, %v411
    %v568 = vpack.c.b16 %v418, %v412
    %v569 = vpack.c.b16 %v419, %v413
    %v570 = vpack.c.b16 %v420, %v414
    %v571 = vpack.c.b16 %v421, %v415
    %v572 = vpack.c.b16 %v422, %v416
    %v573 = vpack.c.b16 %v429, %v423
    %v574 = vpack.c.b16 %v430, %v424
    %v575 = vpack.c.b16 %v431, %v425
    %v576 = vpack.c.b16 %v432, %v426
    %v577 = vpack.c.b16 %v433, %v427
    %v578 = vpack.c.b16 %v434, %v428
    %v579 = vpack.c.b16 %v441, %v435
    %v580 = vpack.c.b16 %v442, %v436
    %v581 = vpack.c.b16 %v443, %v437
    %v582 = vpack.c.b16 %v444, %v438
    %v583 = vpack.c.b16 %v445, %v439
    %v584 = vpack.c.b16 %v446, %v440
    %v585 = vpack.c.b16 %v453, %v447
    %v586 = vpack.c.b16 %v454, %v448
    %v587 = vpack.c.b16 %v455, %v449
    %v588 = vpack.c.b16 %v456, %v450
    %v589 = vpack.c.b16 %v457, %v451
    %v590 = vpack.c.b16 %v458, %v452
    %v591 = vpack.c.b16 %v465, %v459
    %v592 = vpack.c.b16 %v466, %v460
    %v593 = vpack.c.b16 %v467, %v461
    %v594 = vpack.c.b16 %v468, %v462
    %v595 = vpack.c.b16 %v469, %v463
    %v596 = vpack.c.b16 %v470, %v464
    %v597 = vpack.c.b16 %v477, %v471
    %v598 = vpack.c.b16 %v478, %v472
    %v599 = vpack.c.b16 %v479, %v473
    %v600 = vpack.c.b16 %v480, %v474
    %v601 = vpack.c.b16 %v481, %v475
    %v602 = vpack.c.b16 %v482, %v476
    %v603 = vpack.c.b16 %v489, %v483
    %v604 = vpack.c.b16 %v490, %v484
    %v605 = vpack.c.b16 %v491, %v485
    %v606 = vpack.c.b16 %v492, %v486
    %v607 = vpack.c.b16 %v493, %v487
    %v608 = vpack.c.b16 %v494, %v488
    %v609 = vpack.c.b16 %v501, %v495
    %v610 = vpack.c.b16 %v502, %v496
    %v611 = vpack.c.b16 %v503, %v497
    %v612 = vpack.c.b16 %v504, %v498
    %v613 = vpack.c.b16 %v505, %v499
    %v614 = vpack.c.b16 %v506, %v500
    %v615 = vpack.c.b16 %v513, %v507
    %v616 = vpack.c.b16 %v514, %v508
    %v617 = vpack.c.b16 %v515, %v509
    %v618 = vpack.c.b16 %v516, %v510
    %v619 = vpack.c.b16 %v517, %v511
    %v620 = vpack.c.b16 %v518, %v512
    %v621 = vpack.c.b16 %v525, %v519
    %v622 = vpack.c.b16 %v526, %v520
    %v623 = vpack.c.b16 %v527, %v521
    %v624 = vpack.c.b16 %v528, %v522
    %v625 = vpack.c.b16 %v529, %v523
    %v626 = vpack.c.b16 %v530, %v524
    %723 = vmatprep.subr.bf16.mxu0 %v574
    %724 = vmatpush1.bf16.msra.mxu0 %v573
    %725 = vmatprep.subr.bf16.mxu0 %v568
    %726 = vmatpush1.bf16.msra.mxu0 %v567
    %727 = vmatprep.subr.bf16.mxu0 %v562
    %728 = vmatpush1.bf16.msra.mxu0 %v561
    %729 = vmatprep.subr.bf16.mxu0 %v556
    %730 = vmatpush1.bf16.msra.mxu0 %v555
    %731 = vmatprep.subr.bf16.mxu0 %v550
    %732 = vmatpush1.bf16.msra.mxu0 %v549
    %733 = vmatprep.subr.bf16.mxu0 %v544
    %734 = vmatpush1.bf16.msra.mxu0 %v543
    %735 = vmatprep.subr.bf16.mxu0 %v538
    %736 = vmatpush1.bf16.msra.mxu0 %v537
    %737 = vmatprep.subr.bf16.mxu0 %v532
    %738 = vmatpush1.bf16.msra.mxu0 %v531
    %739 = vmatprep.subr.bf16.mxu0 %v622
    %740 = vmatpush2.bf16.msra.mxu0 %v621
    %741 = vmatprep.subr.bf16.mxu0 %v616
    %742 = vmatpush2.bf16.msra.mxu0 %v615
    %743 = vmatprep.subr.bf16.mxu0 %v610
    %744 = vmatpush2.bf16.msra.mxu0 %v609
    %745 = vmatprep.subr.bf16.mxu0 %v604
    %746 = vmatpush2.bf16.msra.mxu0 %v603
    %747 = vmatprep.subr.bf16.mxu0 %v598
    %748 = vmatpush2.bf16.msra.mxu0 %v597
    %749 = vmatprep.subr.bf16.mxu0 %v592
    %750 = vmatpush2.bf16.msra.mxu0 %v591
    %751 = vmatprep.subr.bf16.mxu0 %v586
    %752 = vmatpush2.bf16.msra.mxu0 %v585
    %753 = vmatprep.subr.bf16.mxu0 %v580
    %754 = vmatpush2.bf16.msra.mxu0 %v579
    %755 = vmatprep.mubr.bf16.mxu0 %v146
    %756 = vmatmul.mubr.bf16.gmra.mxu0 %v145
    %v757 = vpop.f32.mrf.mxu0
    %v758 = vadd.f32 0.0, %v757
    %v759 = vpop.f32.mrf.mxu0
    %v760 = vadd.f32 0.0, %v759
    %v761 = vpop.f32.mrf.mxu0
    %v762 = vpop.f32.mrf.mxu0
    %763 = vdwg.mxu0
    %764 = vmatprep.subr.bf16.mxu0 %v576
    %765 = vmatpush1.bf16.msra.mxu0 %v575
    %766 = vmatprep.subr.bf16.mxu0 %v570
    %767 = vmatpush1.bf16.msra.mxu0 %v569
    %768 = vmatprep.subr.bf16.mxu0 %v564
    %769 = vmatpush1.bf16.msra.mxu0 %v563
    %770 = vmatprep.subr.bf16.mxu0 %v558
    %771 = vmatpush1.bf16.msra.mxu0 %v557
    %772 = vmatprep.subr.bf16.mxu0 %v552
    %773 = vmatpush1.bf16.msra.mxu0 %v551
    %774 = vmatprep.subr.bf16.mxu0 %v546
    %775 = vmatpush1.bf16.msra.mxu0 %v545
    %776 = vmatprep.subr.bf16.mxu0 %v540
    %777 = vmatpush1.bf16.msra.mxu0 %v539
    %778 = vmatprep.subr.bf16.mxu0 %v534
    %779 = vmatpush1.bf16.msra.mxu0 %v533
    %780 = vmatprep.subr.bf16.mxu0 %v624
    %781 = vmatpush2.bf16.msra.mxu0 %v623
    %782 = vmatprep.subr.bf16.mxu0 %v618
    %783 = vmatpush2.bf16.msra.mxu0 %v617
    %784 = vmatprep.subr.bf16.mxu0 %v612
    %785 = vmatpush2.bf16.msra.mxu0 %v611
    %786 = vmatprep.subr.bf16.mxu0 %v606
    %787 = vmatpush2.bf16.msra.mxu0 %v605
    %788 = vmatprep.subr.bf16.mxu0 %v600
    %789 = vmatpush2.bf16.msra.mxu0 %v599
    %790 = vmatprep.subr.bf16.mxu0 %v594
    %791 = vmatpush2.bf16.msra.mxu0 %v593
    %792 = vmatprep.subr.bf16.mxu0 %v588
    %793 = vmatpush2.bf16.msra.mxu0 %v587
    %794 = vmatprep.subr.bf16.mxu0 %v582
    %795 = vmatpush2.bf16.msra.mxu0 %v581
    %796 = vmatprep.mubr.bf16.mxu0 %v146
    %797 = vmatmul.mubr.bf16.gmra.mxu0 %v145
    %v798 = vpop.f32.mrf.mxu0
    %v799 = vadd.f32 0.0, %v798
    %v800 = vpop.f32.mrf.mxu0
    %v801 = vadd.f32 0.0, %v800
    %v802 = vpop.f32.mrf.mxu0
    %v803 = vpop.f32.mrf.mxu0
    %804 = vdwg.mxu0
    %805 = vmatprep.subr.bf16.mxu0 %v578
    %806 = vmatpush1.bf16.msra.mxu0 %v577
    %807 = vmatprep.subr.bf16.mxu0 %v572
    %808 = vmatpush1.bf16.msra.mxu0 %v571
    %809 = vmatprep.subr.bf16.mxu0 %v566
    %810 = vmatpush1.bf16.msra.mxu0 %v565
    %811 = vmatprep.subr.bf16.mxu0 %v560
    %812 = vmatpush1.bf16.msra.mxu0 %v559
    %813 = vmatprep.subr.bf16.mxu0 %v554
    %814 = vmatpush1.bf16.msra.mxu0 %v553
    %815 = vmatprep.subr.bf16.mxu0 %v548
    %816 = vmatpush1.bf16.msra.mxu0 %v547
    %817 = vmatprep.subr.bf16.mxu0 %v542
    %818 = vmatpush1.bf16.msra.mxu0 %v541
    %819 = vmatprep.subr.bf16.mxu0 %v536
    %820 = vmatpush1.bf16.msra.mxu0 %v535
    %821 = vmatprep.subr.bf16.mxu0 %v626
    %822 = vmatpush2.bf16.msra.mxu0 %v625
    %823 = vmatprep.subr.bf16.mxu0 %v620
    %824 = vmatpush2.bf16.msra.mxu0 %v619
    %825 = vmatprep.subr.bf16.mxu0 %v614
    %826 = vmatpush2.bf16.msra.mxu0 %v613
    %827 = vmatprep.subr.bf16.mxu0 %v608
    %828 = vmatpush2.bf16.msra.mxu0 %v607
    %829 = vmatprep.subr.bf16.mxu0 %v602
    %830 = vmatpush2.bf16.msra.mxu0 %v601
    %831 = vmatprep.subr.bf16.mxu0 %v596
    %832 = vmatpush2.bf16.msra.mxu0 %v595
    %833 = vmatprep.subr.bf16.mxu0 %v590
    %834 = vmatpush2.bf16.msra.mxu0 %v589
    %835 = vmatprep.subr.bf16.mxu0 %v584
    %836 = vmatpush2.bf16.msra.mxu0 %v583
    %837 = vmatprep.mubr.bf16.mxu0 %v146
    %838 = vmatmul.mubr.bf16.gmra.mxu0 %v145
    %v839 = vpop.f32.mrf.mxu0
    %v840 = vadd.f32 0.0, %v839
    %v841 = vpop.f32.mrf.mxu0
    %v842 = vadd.f32 0.0, %v841
    %v843 = vpop.f32.mrf.mxu0
    %v844 = vpop.f32.mrf.mxu0
    %845 = vdwg.mxu0
    %v846 = vrot.slane %v758, 7
    %v847 = vrot.slane %v760, 7
    %v848 = vsel %vm137, %v846, 0.0
    %v849 = vsel %vm137, %v847, 0.0
    %v850 = vrot.slane %v840, 1
    %v851 = vrot.slane %v842, 1
    %v852 = vsel %vm138, %v850, 0.0
    %v853 = vsel %vm138, %v851, 0.0
    %v854 = vadd.f32 %v799, %v848
    %v855 = vadd.f32 %v801, %v849
    %v856 = vadd.f32 %v854, %v852
    %v857 = vadd.f32 %v855, %v853
    %v858 = vrot.slane %v856, 4
    %v859 = vadd.f32 %v856, %v858
    %v860 = vrot.slane %v859, 2
    %v861 = vadd.f32 %v859, %v860
    %v862 = vrot.slane %v861, 1
    %v863 = vadd.f32 %v861, %v862
    %v864 = vrot.slane %v857, 4
    %v865 = vadd.f32 %v857, %v864
    %v866 = vrot.slane %v865, 2
    %v867 = vadd.f32 %v865, %v866
    %v868 = vrot.slane %v867, 1
    %v869 = vadd.f32 %v867, %v868
    %v870 = vmul.f32 %v856, %v856
    %v871 = vmul.f32 %v857, %v857
    %v872 = vrot.slane %v870, 4
    %v873 = vadd.f32 %v870, %v872
    %v874 = vrot.slane %v873, 2
    %v875 = vadd.f32 %v873, %v874
    %v876 = vrot.slane %v875, 1
    %v877 = vadd.f32 %v875, %v876
    %v878 = vrot.slane %v871, 4
    %v879 = vadd.f32 %v871, %v878
    %v880 = vrot.slane %v879, 2
    %v881 = vadd.f32 %v879, %v880
    %v882 = vrot.slane %v881, 1
    %v883 = vadd.f32 %v881, %v882
    %vm884 = vcmask 1040384
    %v885 = vsel %vm884, %v863, %v877
    %v886 = vsel %vm884, %v869, %v883
    %887 = vmatprep.subr.mxu0 %v90
    %888 = vmatpush1.msra.mxu0 %v89
    %889 = vmatprep.subr.mxu0 %v88
    %890 = vmatpush1.msra.mxu0 %v87
    %891 = vmatprep.subr.mxu0 %v86
    %892 = vmatpush1.msra.mxu0 %v85
    %893 = vmatprep.subr.mxu0 %v84
    %894 = vmatpush1.msra.mxu0 %v83
    %895 = vmatprep.subr.mxu0 %v82
    %896 = vmatpush1.msra.mxu0 %v81
    %897 = vmatprep.subr.mxu0 %v80
    %898 = vmatpush1.msra.mxu0 %v79
    %899 = vmatprep.subr.mxu0 %v78
    %900 = vmatpush1.msra.mxu0 %v77
    %901 = vmatprep.subr.mxu0 %v76
    %902 = vmatpush1.msra.mxu0 %v75
    %903 = vmatprep.subr.mxu0 %v74
    %904 = vmatpush1.msra.mxu0 %v73
    %905 = vmatprep.subr.mxu0 %v72
    %906 = vmatpush1.msra.mxu0 %v71
    %907 = vmatprep.subr.mxu0 %v70
    %908 = vmatpush1.msra.mxu0 %v69
    %909 = vmatprep.subr.mxu0 %v68
    %910 = vmatpush1.msra.mxu0 %v67
    %911 = vmatprep.subr.mxu0 %v66
    %912 = vmatpush1.msra.mxu0 %v65
    %913 = vmatprep.subr.mxu0 %v64
    %914 = vmatpush1.msra.mxu0 %v63
    %915 = vmatprep.subr.mxu0 %v62
    %916 = vmatpush1.msra.mxu0 %v61
    %917 = vmatprep.subr.mxu0 %v60
    %918 = vmatpush1.msra.mxu0 %v59
    %919 = vmatprep.subr.mxu0 %v122
    %920 = vmatpush2.msra.mxu0 %v121
    %921 = vmatprep.subr.mxu0 %v120
    %922 = vmatpush2.msra.mxu0 %v119
    %923 = vmatprep.subr.mxu0 %v118
    %924 = vmatpush2.msra.mxu0 %v117
    %925 = vmatprep.subr.mxu0 %v116
    %926 = vmatpush2.msra.mxu0 %v115
    %927 = vmatprep.subr.mxu0 %v114
    %928 = vmatpush2.msra.mxu0 %v113
    %929 = vmatprep.subr.mxu0 %v112
    %930 = vmatpush2.msra.mxu0 %v111
    %931 = vmatprep.subr.mxu0 %v110
    %932 = vmatpush2.msra.mxu0 %v109
    %933 = vmatprep.subr.mxu0 %v108
    %934 = vmatpush2.msra.mxu0 %v107
    %935 = vmatprep.subr.mxu0 %v106
    %936 = vmatpush2.msra.mxu0 %v105
    %937 = vmatprep.subr.mxu0 %v104
    %938 = vmatpush2.msra.mxu0 %v103
    %939 = vmatprep.subr.mxu0 %v102
    %940 = vmatpush2.msra.mxu0 %v101
    %941 = vmatprep.subr.mxu0 %v100
    %942 = vmatpush2.msra.mxu0 %v99
    %943 = vmatprep.subr.mxu0 %v98
    %944 = vmatpush2.msra.mxu0 %v97
    %945 = vmatprep.subr.mxu0 %v96
    %946 = vmatpush2.msra.mxu0 %v95
    %947 = vmatprep.subr.mxu0 %v94
    %948 = vmatpush2.msra.mxu0 %v93
    %949 = vmatprep.subr.mxu0 %v92
    %950 = vmatpush2.msra.mxu0 %v91
    %951 = vmatprep.mubr.f32.mxu0 %v886
    %952 = vmatmul.mubr.f32.gmra.mxu0 %v885
    %v953 = vpop.f32.mrf.mxu0
    %v954 = vadd.f32 0.0, %v953
    %v955 = vpop.f32.mrf.mxu0
    %v956 = vadd.f32 0.0, %v955
    %957 = vdwg.mxu0
    %v958 = vmul.f32 %v954, 0.001953125
    %v959 = vmul.f32 %v956, 0.001953125
    %v960 = vmul.f32 %v958, %v958
    %v961 = vmul.f32 %v959, %v959
    %v964 = vrot.slane %v960, 7
    %v965 = vrot.slane %v961, 7
    %v968 = vsub.f32 %v958, %v964
    %v969 = vsub.f32 %v959, %v965
    %v970 = vld [vmem:[%s2] sm:$0x3]
    %v971 = vadd.f32 %v968, 1e-05
    %v972 = vadd.f32 %v969, 1e-05
    %v973 = vrsqrt.pop %v971
    %v974 = vrsqrt.pop %v972
    %v977 = vcombine.low %v973, %v974
    %v979 = vunpack.c.l.s4 1966171168
    %v980 = vunpack.c.0.s8 %v979
    %v981 = vlaneseq
    %v982 = vshrl.u32 %v981, 7
    %v983 = vsub.s32 %v980, %v982
    %v984 = vrot.slane %v977, %v983
    %v985 = vcombine.high %v984, %v984
    %v987 = vunpack.c.l.s4 1966171168
    %v988 = vunpack.c.0.s8 %v987
    %v989 = vlaneseq
    %v990 = vshrl.u32 %v989, 7
    %v991 = vsub.s32 %v988, %v990
    %v992 = vrot.slane %v985, %v991
    %v994 = vmul.f32 %v970, %v992
    %v995 = vld [vmem:[%s3] sm:$0x3]
    %v997 = vlaneseq
    %v998 = vshrl.u32 %v997, 7
    %v999 = vsub.s32 0, %v998
    %v1000 = vrot.slane %v994, %v999
    %v1001 = vlaneseq
    %v1002 = vshrl.u32 %v1001, 7
    %v1003 = vsub.s32 1, %v1002
    %v1004 = vrot.slane %v994, %v1003
    %v1007 = vmul.f32 %v958, %v1000
    %v1008 = vmul.f32 %v959, %v1004
    %v1011 = vcombine.low %v1007, %v1008
    %v1013 = vunpack.c.l.s4 1966171168
    %v1014 = vunpack.c.0.s8 %v1013
    %v1015 = vlaneseq
    %v1016 = vshrl.u32 %v1015, 7
    %v1017 = vsub.s32 %v1014, %v1016
    %v1018 = vrot.slane %v1011, %v1017
    %v1020 = vunpack.c.l.s4 1966171168
    %v1021 = vunpack.c.0.s8 %v1020
    %v1022 = vlaneseq
    %v1023 = vshrl.u32 %v1022, 7
    %v1024 = vsub.s32 %v1021, %v1023
    %v1025 = vrot.slane %v1018, %v1024
    %v1027 = vsub.f32 %v995, %v1025
    %v1028 = vmul.f32 %v856, %v1000
    %v1029 = vmul.f32 %v857, %v1004
    %v1031 = vlaneseq
    %v1032 = vshrl.u32 %v1031, 7
    %v1033 = vsub.s32 0, %v1032
    %v1034 = vrot.slane %v1027, %v1033
    %v1035 = vlaneseq
    %v1036 = vshrl.u32 %v1035, 7
    %v1037 = vsub.s32 1, %v1036
    %v1038 = vrot.slane %v1027, %v1037
    %v1041 = vadd.f32 %v1028, %v1034
    %v1042 = vadd.f32 %v1029, %v1038
    %v1043 = vmax.f32 %v1041, 0.0
    %v1044 = vmax.f32 %v1042, 0.0
    %v1045 = vpack.c.bf16 %v1043, %v1043
    %v1046 = vpack.c.bf16 %v1044, %v1044
    %v1047 = vld [vmem:[#allocation2] sm:$0xff]
    %v1048 = vld [vmem:[#allocation2 + $0x8] sm:$0xff]
    %v1049 = vld [vmem:[#allocation2 + $0x10] sm:$0xff]
    %v1050 = vld [vmem:[#allocation2 + $0x18] sm:$0xff]
    %v1051 = vld [vmem:[#allocation2 + $0x20] sm:$0xff]
    %v1052 = vld [vmem:[#allocation2 + $0x28] sm:$0xff]
    %v1053 = vld [vmem:[#allocation2 + $0x30] sm:$0xff]
    %v1054 = vld [vmem:[#allocation2 + $0x38] sm:$0xff]
    %v1055 = vld [vmem:[#allocation2 + $0x40] sm:$0xff]
    %v1056 = vld [vmem:[#allocation2 + $0x48] sm:$0xff]
    %v1057 = vld [vmem:[#allocation2 + $0x50] sm:$0xff]
    %v1058 = vld [vmem:[#allocation2 + $0x58] sm:$0xff]
    %v1059 = vld [vmem:[#allocation2 + $0x60] sm:$0xff]
    %v1060 = vld [vmem:[#allocation2 + $0x68] sm:$0xff]
    %v1061 = vld [vmem:[#allocation2 + $0x70] sm:$0xff]
    %v1062 = vld [vmem:[#allocation2 + $0x78] sm:$0xff]
    %v1063 = vld [vmem:[#allocation2 + $0x80] sm:$0xff]
    %v1064 = vld [vmem:[#allocation2 + $0x88] sm:$0xff]
    %v1065 = vld [vmem:[#allocation2 + $0x90] sm:$0xff]
    %v1066 = vld [vmem:[#allocation2 + $0x98] sm:$0xff]
    %v1067 = vld [vmem:[#allocation2 + $0xa0] sm:$0xff]
    %v1068 = vld [vmem:[#allocation2 + $0xa8] sm:$0xff]
    %v1069 = vld [vmem:[#allocation2 + $0xb0] sm:$0xff]
    %v1070 = vld [vmem:[#allocation2 + $0xb8] sm:$0xff]
    %v1071 = vld [vmem:[#allocation2 + $0xc0] sm:$0xff]
    %v1072 = vld [vmem:[#allocation2 + $0xc8] sm:$0xff]
    %v1073 = vld [vmem:[#allocation2 + $0xd0] sm:$0xff]
    %v1074 = vld [vmem:[#allocation2 + $0xd8] sm:$0xff]
    %v1075 = vld [vmem:[#allocation2 + $0xe0] sm:$0xff]
    %v1076 = vld [vmem:[#allocation2 + $0xe8] sm:$0xff]
    %v1077 = vld [vmem:[#allocation2 + $0xf0] sm:$0xff]
    %v1078 = vld [vmem:[#allocation2 + $0xf8] sm:$0xff]
    %v1079 = vld [vmem:[#allocation2 + $0x100] sm:$0xff]
    %v1080 = vld [vmem:[#allocation2 + $0x108] sm:$0xff]
    %v1081 = vld [vmem:[#allocation2 + $0x110] sm:$0xff]
    %v1082 = vld [vmem:[#allocation2 + $0x118] sm:$0xff]
    %v1083 = vld [vmem:[#allocation2 + $0x120] sm:$0xff]
    %v1084 = vld [vmem:[#allocation2 + $0x128] sm:$0xff]
    %v1085 = vld [vmem:[#allocation2 + $0x130] sm:$0xff]
    %v1086 = vld [vmem:[#allocation2 + $0x138] sm:$0xff]
    %v1087 = vld [vmem:[#allocation2 + $0x140] sm:$0xff]
    %v1088 = vld [vmem:[#allocation2 + $0x148] sm:$0xff]
    %v1089 = vld [vmem:[#allocation2 + $0x150] sm:$0xff]
    %v1090 = vld [vmem:[#allocation2 + $0x158] sm:$0xff]
    %v1091 = vld [vmem:[#allocation2 + $0x160] sm:$0xff]
    %v1092 = vld [vmem:[#allocation2 + $0x168] sm:$0xff]
    %v1093 = vld [vmem:[#allocation2 + $0x170] sm:$0xff]
    %v1094 = vld [vmem:[#allocation2 + $0x178] sm:$0xff]
    %v1095 = vld [vmem:[#allocation2 + $0x180] sm:$0xff]
    %v1096 = vld [vmem:[#allocation2 + $0x188] sm:$0xff]
    %v1097 = vld [vmem:[#allocation2 + $0x190] sm:$0xff]
    %v1098 = vld [vmem:[#allocation2 + $0x198] sm:$0xff]
    %v1099 = vld [vmem:[#allocation2 + $0x1a0] sm:$0xff]
    %v1100 = vld [vmem:[#allocation2 + $0x1a8] sm:$0xff]
    %v1101 = vld [vmem:[#allocation2 + $0x1b0] sm:$0xff]
    %v1102 = vld [vmem:[#allocation2 + $0x1b8] sm:$0xff]
    %v1103 = vld [vmem:[#allocation2 + $0x1c0] sm:$0xff]
    %v1104 = vld [vmem:[#allocation2 + $0x1c8] sm:$0xff]
    %v1105 = vld [vmem:[#allocation2 + $0x1d0] sm:$0xff]
    %v1106 = vld [vmem:[#allocation2 + $0x1d8] sm:$0xff]
    %v1107 = vld [vmem:[#allocation2 + $0x1e0] sm:$0xff]
    %v1108 = vld [vmem:[#allocation2 + $0x1e8] sm:$0xff]
    %v1109 = vld [vmem:[#allocation2 + $0x1f0] sm:$0xff]
    %v1110 = vld [vmem:[#allocation2 + $0x1f8] sm:$0xff]
    %v1111 = vld [vmem:[#allocation2 + $0x200] sm:$0xff]
    %v1112 = vld [vmem:[#allocation2 + $0x208] sm:$0xff]
    %v1113 = vld [vmem:[#allocation2 + $0x210] sm:$0xff]
    %v1114 = vld [vmem:[#allocation2 + $0x218] sm:$0xff]
    %v1115 = vld [vmem:[#allocation2 + $0x220] sm:$0xff]
    %v1116 = vld [vmem:[#allocation2 + $0x228] sm:$0xff]
    %v1117 = vld [vmem:[#allocation2 + $0x230] sm:$0xff]
    %v1118 = vld [vmem:[#allocation2 + $0x238] sm:$0xff]
    %v1119 = vld [vmem:[#allocation2 + $0x240] sm:$0xff]
    %v1120 = vld [vmem:[#allocation2 + $0x248] sm:$0xff]
    %v1121 = vld [vmem:[#allocation2 + $0x250] sm:$0xff]
    %v1122 = vld [vmem:[#allocation2 + $0x258] sm:$0xff]
    %v1123 = vld [vmem:[#allocation2 + $0x260] sm:$0xff]
    %v1124 = vld [vmem:[#allocation2 + $0x268] sm:$0xff]
    %v1125 = vld [vmem:[#allocation2 + $0x270] sm:$0xff]
    %v1126 = vld [vmem:[#allocation2 + $0x278] sm:$0xff]
    %v1127 = vld [vmem:[#allocation2 + $0x280] sm:$0xff]
    %v1128 = vld [vmem:[#allocation2 + $0x288] sm:$0xff]
    %v1129 = vld [vmem:[#allocation2 + $0x290] sm:$0xff]
    %v1130 = vld [vmem:[#allocation2 + $0x298] sm:$0xff]
    %v1131 = vld [vmem:[#allocation2 + $0x2a0] sm:$0xff]
    %v1132 = vld [vmem:[#allocation2 + $0x2a8] sm:$0xff]
    %v1133 = vld [vmem:[#allocation2 + $0x2b0] sm:$0xff]
    %v1134 = vld [vmem:[#allocation2 + $0x2b8] sm:$0xff]
    %v1135 = vld [vmem:[#allocation2 + $0x2c0] sm:$0xff]
    %v1136 = vld [vmem:[#allocation2 + $0x2c8] sm:$0xff]
    %v1137 = vld [vmem:[#allocation2 + $0x2d0] sm:$0xff]
    %v1138 = vld [vmem:[#allocation2 + $0x2d8] sm:$0xff]
    %v1139 = vld [vmem:[#allocation2 + $0x2e0] sm:$0xff]
    %v1140 = vld [vmem:[#allocation2 + $0x2e8] sm:$0xff]
    %v1141 = vld [vmem:[#allocation2 + $0x2f0] sm:$0xff]
    %v1142 = vld [vmem:[#allocation2 + $0x2f8] sm:$0xff]
    %v1239 = vunpack.c.l.b16 %v1047
    %v1240 = vunpack.c.h.b16 %v1047
    %v1241 = vunpack.c.l.b16 %v1048
    %v1242 = vunpack.c.h.b16 %v1048
    %v1243 = vunpack.c.l.b16 %v1049
    %v1244 = vunpack.c.h.b16 %v1049
    %v1245 = vunpack.c.l.b16 %v1050
    %v1246 = vunpack.c.h.b16 %v1050
    %v1247 = vunpack.c.l.b16 %v1051
    %v1248 = vunpack.c.h.b16 %v1051
    %v1249 = vunpack.c.l.b16 %v1052
    %v1250 = vunpack.c.h.b16 %v1052
    %v1251 = vunpack.c.l.b16 %v1053
    %v1252 = vunpack.c.h.b16 %v1053
    %v1253 = vunpack.c.l.b16 %v1054
    %v1254 = vunpack.c.h.b16 %v1054
    %v1255 = vunpack.c.l.b16 %v1055
    %v1256 = vunpack.c.h.b16 %v1055
    %v1257 = vunpack.c.l.b16 %v1056
    %v1258 = vunpack.c.h.b16 %v1056
    %v1259 = vunpack.c.l.b16 %v1057
    %v1260 = vunpack.c.h.b16 %v1057
    %v1261 = vunpack.c.l.b16 %v1058
    %v1262 = vunpack.c.h.b16 %v1058
    %v1263 = vunpack.c.l.b16 %v1059
    %v1264 = vunpack.c.h.b16 %v1059
    %v1265 = vunpack.c.l.b16 %v1060
    %v1266 = vunpack.c.h.b16 %v1060
    %v1267 = vunpack.c.l.b16 %v1061
    %v1268 = vunpack.c.h.b16 %v1061
    %v1269 = vunpack.c.l.b16 %v1062
    %v1270 = vunpack.c.h.b16 %v1062
    %v1271 = vunpack.c.l.b16 %v1063
    %v1272 = vunpack.c.h.b16 %v1063
    %v1273 = vunpack.c.l.b16 %v1064
    %v1274 = vunpack.c.h.b16 %v1064
    %v1275 = vunpack.c.l.b16 %v1065
    %v1276 = vunpack.c.h.b16 %v1065
    %v1277 = vunpack.c.l.b16 %v1066
    %v1278 = vunpack.c.h.b16 %v1066
    %v1279 = vunpack.c.l.b16 %v1067
    %v1280 = vunpack.c.h.b16 %v1067
    %v1281 = vunpack.c.l.b16 %v1068
    %v1282 = vunpack.c.h.b16 %v1068
    %v1283 = vunpack.c.l.b16 %v1069
    %v1284 = vunpack.c.h.b16 %v1069
    %v1285 = vunpack.c.l.b16 %v1070
    %v1286 = vunpack.c.h.b16 %v1070
    %v1287 = vunpack.c.l.b16 %v1071
    %v1288 = vunpack.c.h.b16 %v1071
    %v1289 = vunpack.c.l.b16 %v1072
    %v1290 = vunpack.c.h.b16 %v1072
    %v1291 = vunpack.c.l.b16 %v1073
    %v1292 = vunpack.c.h.b16 %v1073
    %v1293 = vunpack.c.l.b16 %v1074
    %v1294 = vunpack.c.h.b16 %v1074
    %v1295 = vunpack.c.l.b16 %v1075
    %v1296 = vunpack.c.h.b16 %v1075
    %v1297 = vunpack.c.l.b16 %v1076
    %v1298 = vunpack.c.h.b16 %v1076
    %v1299 = vunpack.c.l.b16 %v1077
    %v1300 = vunpack.c.h.b16 %v1077
    %v1301 = vunpack.c.l.b16 %v1078
    %v1302 = vunpack.c.h.b16 %v1078
    %v1303 = vunpack.c.l.b16 %v1079
    %v1304 = vunpack.c.h.b16 %v1079
    %v1305 = vunpack.c.l.b16 %v1080
    %v1306 = vunpack.c.h.b16 %v1080
    %v1307 = vunpack.c.l.b16 %v1081
    %v1308 = vunpack.c.h.b16 %v1081
    %v1309 = vunpack.c.l.b16 %v1082
    %v1310 = vunpack.c.h.b16 %v1082
    %v1311 = vunpack.c.l.b16 %v1083
    %v1312 = vunpack.c.h.b16 %v1083
    %v1313 = vunpack.c.l.b16 %v1084
    %v1314 = vunpack.c.h.b16 %v1084
    %v1315 = vunpack.c.l.b16 %v1085
    %v1316 = vunpack.c.h.b16 %v1085
    %v1317 = vunpack.c.l.b16 %v1086
    %v1318 = vunpack.c.h.b16 %v1086
    %v1319 = vunpack.c.l.b16 %v1087
    %v1320 = vunpack.c.h.b16 %v1087
    %v1321 = vunpack.c.l.b16 %v1088
    %v1322 = vunpack.c.h.b16 %v1088
    %v1323 = vunpack.c.l.b16 %v1089
    %v1324 = vunpack.c.h.b16 %v1089
    %v1325 = vunpack.c.l.b16 %v1090
    %v1326 = vunpack.c.h.b16 %v1090
    %v1327 = vunpack.c.l.b16 %v1091
    %v1328 = vunpack.c.h.b16 %v1091
    %v1329 = vunpack.c.l.b16 %v1092
    %v1330 = vunpack.c.h.b16 %v1092
    %v1331 = vunpack.c.l.b16 %v1093
    %v1332 = vunpack.c.h.b16 %v1093
    %v1333 = vunpack.c.l.b16 %v1094
    %v1334 = vunpack.c.h.b16 %v1094
    %v1335 = vunpack.c.l.b16 %v1095
    %v1336 = vunpack.c.h.b16 %v1095
    %v1337 = vunpack.c.l.b16 %v1096
    %v1338 = vunpack.c.h.b16 %v1096
    %v1339 = vunpack.c.l.b16 %v1097
    %v1340 = vunpack.c.h.b16 %v1097
    %v1341 = vunpack.c.l.b16 %v1098
    %v1342 = vunpack.c.h.b16 %v1098
    %v1343 = vunpack.c.l.b16 %v1099
    %v1344 = vunpack.c.h.b16 %v1099
    %v1345 = vunpack.c.l.b16 %v1100
    %v1346 = vunpack.c.h.b16 %v1100
    %v1347 = vunpack.c.l.b16 %v1101
    %v1348 = vunpack.c.h.b16 %v1101
    %v1349 = vunpack.c.l.b16 %v1102
    %v1350 = vunpack.c.h.b16 %v1102
    %v1351 = vunpack.c.l.b16 %v1103
    %v1352 = vunpack.c.h.b16 %v1103
    %v1353 = vunpack.c.l.b16 %v1104
    %v1354 = vunpack.c.h.b16 %v1104
    %v1355 = vunpack.c.l.b16 %v1105
    %v1356 = vunpack.c.h.b16 %v1105
    %v1357 = vunpack.c.l.b16 %v1106
    %v1358 = vunpack.c.h.b16 %v1106
    %v1359 = vunpack.c.l.b16 %v1107
    %v1360 = vunpack.c.h.b16 %v1107
    %v1361 = vunpack.c.l.b16 %v1108
    %v1362 = vunpack.c.h.b16 %v1108
    %v1363 = vunpack.c.l.b16 %v1109
    %v1364 = vunpack.c.h.b16 %v1109
    %v1365 = vunpack.c.l.b16 %v1110
    %v1366 = vunpack.c.h.b16 %v1110
    %v1367 = vunpack.c.l.b16 %v1111
    %v1368 = vunpack.c.h.b16 %v1111
    %v1369 = vunpack.c.l.b16 %v1112
    %v1370 = vunpack.c.h.b16 %v1112
    %v1371 = vunpack.c.l.b16 %v1113
    %v1372 = vunpack.c.h.b16 %v1113
    %v1373 = vunpack.c.l.b16 %v1114
    %v1374 = vunpack.c.h.b16 %v1114
    %v1375 = vunpack.c.l.b16 %v1115
    %v1376 = vunpack.c.h.b16 %v1115
    %v1377 = vunpack.c.l.b16 %v1116
    %v1378 = vunpack.c.h.b16 %v1116
    %v1379 = vunpack.c.l.b16 %v1117
    %v1380 = vunpack.c.h.b16 %v1117
    %v1381 = vunpack.c.l.b16 %v1118
    %v1382 = vunpack.c.h.b16 %v1118
    %v1383 = vunpack.c.l.b16 %v1119
    %v1384 = vunpack.c.h.b16 %v1119
    %v1385 = vunpack.c.l.b16 %v1120
    %v1386 = vunpack.c.h.b16 %v1120
    %v1387 = vunpack.c.l.b16 %v1121
    %v1388 = vunpack.c.h.b16 %v1121
    %v1389 = vunpack.c.l.b16 %v1122
    %v1390 = vunpack.c.h.b16 %v1122
    %v1391 = vunpack.c.l.b16 %v1123
    %v1392 = vunpack.c.h.b16 %v1123
    %v1393 = vunpack.c.l.b16 %v1124
    %v1394 = vunpack.c.h.b16 %v1124
    %v1395 = vunpack.c.l.b16 %v1125
    %v1396 = vunpack.c.h.b16 %v1125
    %v1397 = vunpack.c.l.b16 %v1126
    %v1398 = vunpack.c.h.b16 %v1126
    %v1399 = vunpack.c.l.b16 %v1127
    %v1400 = vunpack.c.h.b16 %v1127
    %v1401 = vunpack.c.l.b16 %v1128
    %v1402 = vunpack.c.h.b16 %v1128
    %v1403 = vunpack.c.l.b16 %v1129
    %v1404 = vunpack.c.h.b16 %v1129
    %v1405 = vunpack.c.l.b16 %v1130
    %v1406 = vunpack.c.h.b16 %v1130
    %v1407 = vunpack.c.l.b16 %v1131
    %v1408 = vunpack.c.h.b16 %v1131
    %v1409 = vunpack.c.l.b16 %v1132
    %v1410 = vunpack.c.h.b16 %v1132
    %v1411 = vunpack.c.l.b16 %v1133
    %v1412 = vunpack.c.h.b16 %v1133
    %v1413 = vunpack.c.l.b16 %v1134
    %v1414 = vunpack.c.h.b16 %v1134
    %v1415 = vunpack.c.l.b16 %v1135
    %v1416 = vunpack.c.h.b16 %v1135
    %v1417 = vunpack.c.l.b16 %v1136
    %v1418 = vunpack.c.h.b16 %v1136
    %v1419 = vunpack.c.l.b16 %v1137
    %v1420 = vunpack.c.h.b16 %v1137
    %v1421 = vunpack.c.l.b16 %v1138
    %v1422 = vunpack.c.h.b16 %v1138
    %v1423 = vunpack.c.l.b16 %v1139
    %v1424 = vunpack.c.h.b16 %v1139
    %v1425 = vunpack.c.l.b16 %v1140
    %v1426 = vunpack.c.h.b16 %v1140
    %v1427 = vunpack.c.l.b16 %v1141
    %v1428 = vunpack.c.h.b16 %v1141
    %v1429 = vunpack.c.l.b16 %v1142
    %v1430 = vunpack.c.h.b16 %v1142
    %v1431 = vpack.c.b16 %v1245, %v1239
    %v1432 = vpack.c.b16 %v1246, %v1240
    %v1433 = vpack.c.b16 %v1247, %v1241
    %v1434 = vpack.c.b16 %v1248, %v1242
    %v1435 = vpack.c.b16 %v1249, %v1243
    %v1436 = vpack.c.b16 %v1250, %v1244
    %v1437 = vpack.c.b16 %v1257, %v1251
    %v1438 = vpack.c.b16 %v1258, %v1252
    %v1439 = vpack.c.b16 %v1259, %v1253
    %v1440 = vpack.c.b16 %v1260, %v1254
    %v1441 = vpack.c.b16 %v1261, %v1255
    %v1442 = vpack.c.b16 %v1262, %v1256
    %v1443 = vpack.c.b16 %v1269, %v1263
    %v1444 = vpack.c.b16 %v1270, %v1264
    %v1445 = vpack.c.b16 %v1271, %v1265
    %v1446 = vpack.c.b16 %v1272, %v1266
    %v1447 = vpack.c.b16 %v1273, %v1267
    %v1448 = vpack.c.b16 %v1274, %v1268
    %v1449 = vpack.c.b16 %v1281, %v1275
    %v1450 = vpack.c.b16 %v1282, %v1276
    %v1451 = vpack.c.b16 %v1283, %v1277
    %v1452 = vpack.c.b16 %v1284, %v1278
    %v1453 = vpack.c.b16 %v1285, %v1279
    %v1454 = vpack.c.b16 %v1286, %v1280
    %v1455 = vpack.c.b16 %v1293, %v1287
    %v1456 = vpack.c.b16 %v1294, %v1288
    %v1457 = vpack.c.b16 %v1295, %v1289
    %v1458 = vpack.c.b16 %v1296, %v1290
    %v1459 = vpack.c.b16 %v1297, %v1291
    %v1460 = vpack.c.b16 %v1298, %v1292
    %v1461 = vpack.c.b16 %v1305, %v1299
    %v1462 = vpack.c.b16 %v1306, %v1300
    %v1463 = vpack.c.b16 %v1307, %v1301
    %v1464 = vpack.c.b16 %v1308, %v1302
    %v1465 = vpack.c.b16 %v1309, %v1303
    %v1466 = vpack.c.b16 %v1310, %v1304
    %v1467 = vpack.c.b16 %v1317, %v1311
    %v1468 = vpack.c.b16 %v1318, %v1312
    %v1469 = vpack.c.b16 %v1319, %v1313
    %v1470 = vpack.c.b16 %v1320, %v1314
    %v1471 = vpack.c.b16 %v1321, %v1315
    %v1472 = vpack.c.b16 %v1322, %v1316
    %v1473 = vpack.c.b16 %v1329, %v1323
    %v1474 = vpack.c.b16 %v1330, %v1324
    %v1475 = vpack.c.b16 %v1331, %v1325
    %v1476 = vpack.c.b16 %v1332, %v1326
    %v1477 = vpack.c.b16 %v1333, %v1327
    %v1478 = vpack.c.b16 %v1334, %v1328
    %v1479 = vpack.c.b16 %v1341, %v1335
    %v1480 = vpack.c.b16 %v1342, %v1336
    %v1481 = vpack.c.b16 %v1343, %v1337
    %v1482 = vpack.c.b16 %v1344, %v1338
    %v1483 = vpack.c.b16 %v1345, %v1339
    %v1484 = vpack.c.b16 %v1346, %v1340
    %v1485 = vpack.c.b16 %v1353, %v1347
    %v1486 = vpack.c.b16 %v1354, %v1348
    %v1487 = vpack.c.b16 %v1355, %v1349
    %v1488 = vpack.c.b16 %v1356, %v1350
    %v1489 = vpack.c.b16 %v1357, %v1351
    %v1490 = vpack.c.b16 %v1358, %v1352
    %v1491 = vpack.c.b16 %v1365, %v1359
    %v1492 = vpack.c.b16 %v1366, %v1360
    %v1493 = vpack.c.b16 %v1367, %v1361
    %v1494 = vpack.c.b16 %v1368, %v1362
    %v1495 = vpack.c.b16 %v1369, %v1363
    %v1496 = vpack.c.b16 %v1370, %v1364
    %v1497 = vpack.c.b16 %v1377, %v1371
    %v1498 = vpack.c.b16 %v1378, %v1372
    %v1499 = vpack.c.b16 %v1379, %v1373
    %v1500 = vpack.c.b16 %v1380, %v1374
    %v1501 = vpack.c.b16 %v1381, %v1375
    %v1502 = vpack.c.b16 %v1382, %v1376
    %v1503 = vpack.c.b16 %v1389, %v1383
    %v1504 = vpack.c.b16 %v1390, %v1384
    %v1505 = vpack.c.b16 %v1391, %v1385
    %v1506 = vpack.c.b16 %v1392, %v1386
    %v1507 = vpack.c.b16 %v1393, %v1387
    %v1508 = vpack.c.b16 %v1394, %v1388
    %v1509 = vpack.c.b16 %v1401, %v1395
    %v1510 = vpack.c.b16 %v1402, %v1396
    %v1511 = vpack.c.b16 %v1403, %v1397
    %v1512 = vpack.c.b16 %v1404, %v1398
    %v1513 = vpack.c.b16 %v1405, %v1399
    %v1514 = vpack.c.b16 %v1406, %v1400
    %v1515 = vpack.c.b16 %v1413, %v1407
    %v1516 = vpack.c.b16 %v1414, %v1408
    %v1517 = vpack.c.b16 %v1415, %v1409
    %v1518 = vpack.c.b16 %v1416, %v1410
    %v1519 = vpack.c.b16 %v1417, %v1411
    %v1520 = vpack.c.b16 %v1418, %v1412
    %v1521 = vpack.c.b16 %v1425, %v1419
    %v1522 = vpack.c.b16 %v1426, %v1420
    %v1523 = vpack.c.b16 %v1427, %v1421
    %v1524 = vpack.c.b16 %v1428, %v1422
    %v1525 = vpack.c.b16 %v1429, %v1423
    %v1526 = vpack.c.b16 %v1430, %v1424
    %1623 = vmatprep.subr.bf16.mxu0 %v1474
    %1624 = vmatpush1.bf16.msra.mxu0 %v1473
    %1625 = vmatprep.subr.bf16.mxu0 %v1468
    %1626 = vmatpush1.bf16.msra.mxu0 %v1467
    %1627 = vmatprep.subr.bf16.mxu0 %v1462
    %1628 = vmatpush1.bf16.msra.mxu0 %v1461
    %1629 = vmatprep.subr.bf16.mxu0 %v1456
    %1630 = vmatpush1.bf16.msra.mxu0 %v1455
    %1631 = vmatprep.subr.bf16.mxu0 %v1450
    %1632 = vmatpush1.bf16.msra.mxu0 %v1449
    %1633 = vmatprep.subr.bf16.mxu0 %v1444
    %1634 = vmatpush1.bf16.msra.mxu0 %v1443
    %1635 = vmatprep.subr.bf16.mxu0 %v1438
    %1636 = vmatpush1.bf16.msra.mxu0 %v1437
    %1637 = vmatprep.subr.bf16.mxu0 %v1432
    %1638 = vmatpush1.bf16.msra.mxu0 %v1431
    %1639 = vmatprep.subr.bf16.mxu0 %v1522
    %1640 = vmatpush2.bf16.msra.mxu0 %v1521
    %1641 = vmatprep.subr.bf16.mxu0 %v1516
    %1642 = vmatpush2.bf16.msra.mxu0 %v1515
    %1643 = vmatprep.subr.bf16.mxu0 %v1510
    %1644 = vmatpush2.bf16.msra.mxu0 %v1509
    %1645 = vmatprep.subr.bf16.mxu0 %v1504
    %1646 = vmatpush2.bf16.msra.mxu0 %v1503
    %1647 = vmatprep.subr.bf16.mxu0 %v1498
    %1648 = vmatpush2.bf16.msra.mxu0 %v1497
    %1649 = vmatprep.subr.bf16.mxu0 %v1492
    %1650 = vmatpush2.bf16.msra.mxu0 %v1491
    %1651 = vmatprep.subr.bf16.mxu0 %v1486
    %1652 = vmatpush2.bf16.msra.mxu0 %v1485
    %1653 = vmatprep.subr.bf16.mxu0 %v1480
    %1654 = vmatpush2.bf16.msra.mxu0 %v1479
    %1655 = vmatprep.mubr.bf16.mxu0 %v1046
    %1656 = vmatmul.mubr.bf16.gmra.mxu0 %v1045
    %v1657 = vpop.f32.mrf.mxu0
    %v1658 = vadd.f32 0.0, %v1657
    %v1659 = vpop.f32.mrf.mxu0
    %v1660 = vadd.f32 0.0, %v1659
    %v1661 = vpop.f32.mrf.mxu0
    %v1662 = vpop.f32.mrf.mxu0
    %1663 = vdwg.mxu0
    %1664 = vmatprep.subr.bf16.mxu0 %v1476
    %1665 = vmatpush1.bf16.msra.mxu0 %v1475
    %1666 = vmatprep.subr.bf16.mxu0 %v1470
    %1667 = vmatpush1.bf16.msra.mxu0 %v1469
    %1668 = vmatprep.subr.bf16.mxu0 %v1464
    %1669 = vmatpush1.bf16.msra.mxu0 %v1463
    %1670 = vmatprep.subr.bf16.mxu0 %v1458
    %1671 = vmatpush1.bf16.msra.mxu0 %v1457
    %1672 = vmatprep.subr.bf16.mxu0 %v1452
    %1673 = vmatpush1.bf16.msra.mxu0 %v1451
    %1674 = vmatprep.subr.bf16.mxu0 %v1446
    %1675 = vmatpush1.bf16.msra.mxu0 %v1445
    %1676 = vmatprep.subr.bf16.mxu0 %v1440
    %1677 = vmatpush1.bf16.msra.mxu0 %v1439
    %1678 = vmatprep.subr.bf16.mxu0 %v1434
    %1679 = vmatpush1.bf16.msra.mxu0 %v1433
    %1680 = vmatprep.subr.bf16.mxu0 %v1524
    %1681 = vmatpush2.bf16.msra.mxu0 %v1523
    %1682 = vmatprep.subr.bf16.mxu0 %v1518
    %1683 = vmatpush2.bf16.msra.mxu0 %v1517
    %1684 = vmatprep.subr.bf16.mxu0 %v1512
    %1685 = vmatpush2.bf16.msra.mxu0 %v1511
    %1686 = vmatprep.subr.bf16.mxu0 %v1506
    %1687 = vmatpush2.bf16.msra.mxu0 %v1505
    %1688 = vmatprep.subr.bf16.mxu0 %v1500
    %1689 = vmatpush2.bf16.msra.mxu0 %v1499
    %1690 = vmatprep.subr.bf16.mxu0 %v1494
    %1691 = vmatpush2.bf16.msra.mxu0 %v1493
    %1692 = vmatprep.subr.bf16.mxu0 %v1488
    %1693 = vmatpush2.bf16.msra.mxu0 %v1487
    %1694 = vmatprep.subr.bf16.mxu0 %v1482
    %1695 = vmatpush2.bf16.msra.mxu0 %v1481
    %1696 = vmatprep.mubr.bf16.mxu0 %v1046
    %1697 = vmatmul.mubr.bf16.gmra.mxu0 %v1045
    %v1698 = vpop.f32.mrf.mxu0
    %v1699 = vadd.f32 0.0, %v1698
    %v1700 = vpop.f32.mrf.mxu0
    %v1701 = vadd.f32 0.0, %v1700
    %v1702 = vpop.f32.mrf.mxu0
    %v1703 = vpop.f32.mrf.mxu0
    %1704 = vdwg.mxu0
    %1705 = vmatprep.subr.bf16.mxu0 %v1478
    %1706 = vmatpush1.bf16.msra.mxu0 %v1477
    %1707 = vmatprep.subr.bf16.mxu0 %v1472
    %1708 = vmatpush1.bf16.msra.mxu0 %v1471
    %1709 = vmatprep.subr.bf16.mxu0 %v1466
    %1710 = vmatpush1.bf16.msra.mxu0 %v1465
    %1711 = vmatprep.subr.bf16.mxu0 %v1460
    %1712 = vmatpush1.bf16.msra.mxu0 %v1459
    %1713 = vmatprep.subr.bf16.mxu0 %v1454
    %1714 = vmatpush1.bf16.msra.mxu0 %v1453
    %1715 = vmatprep.subr.bf16.mxu0 %v1448
    %1716 = vmatpush1.bf16.msra.mxu0 %v1447
    %1717 = vmatprep.subr.bf16.mxu0 %v1442
    %1718 = vmatpush1.bf16.msra.mxu0 %v1441
    %1719 = vmatprep.subr.bf16.mxu0 %v1436
    %1720 = vmatpush1.bf16.msra.mxu0 %v1435
    %1721 = vmatprep.subr.bf16.mxu0 %v1526
    %1722 = vmatpush2.bf16.msra.mxu0 %v1525
    %1723 = vmatprep.subr.bf16.mxu0 %v1520
    %1724 = vmatpush2.bf16.msra.mxu0 %v1519
    %1725 = vmatprep.subr.bf16.mxu0 %v1514
    %1726 = vmatpush2.bf16.msra.mxu0 %v1513
    %1727 = vmatprep.subr.bf16.mxu0 %v1508
    %1728 = vmatpush2.bf16.msra.mxu0 %v1507
    %1729 = vmatprep.subr.bf16.mxu0 %v1502
    %1730 = vmatpush2.bf16.msra.mxu0 %v1501
    %1731 = vmatprep.subr.bf16.mxu0 %v1496
    %1732 = vmatpush2.bf16.msra.mxu0 %v1495
    %1733 = vmatprep.subr.bf16.mxu0 %v1490
    %1734 = vmatpush2.bf16.msra.mxu0 %v1489
    %1735 = vmatprep.subr.bf16.mxu0 %v1484
    %1736 = vmatpush2.bf16.msra.mxu0 %v1483
    %1737 = vmatprep.mubr.bf16.mxu0 %v1046
    %1738 = vmatmul.mubr.bf16.gmra.mxu0 %v1045
    %v1739 = vpop.f32.mrf.mxu0
    %v1740 = vadd.f32 0.0, %v1739
    %v1741 = vpop.f32.mrf.mxu0
    %v1742 = vadd.f32 0.0, %v1741
    %v1743 = vpop.f32.mrf.mxu0
    %v1744 = vpop.f32.mrf.mxu0
    %1745 = vdwg.mxu0
    %v1746 = vrot.slane %v1658, 7
    %v1747 = vrot.slane %v1660, 7
    %v1748 = vsel %vm137, %v1746, 0.0
    %v1749 = vsel %vm137, %v1747, 0.0
    %v1750 = vrot.slane %v1740, 1
    %v1751 = vrot.slane %v1742, 1
    %v1752 = vsel %vm138, %v1750, 0.0
    %v1753 = vsel %vm138, %v1751, 0.0
    %v1754 = vadd.f32 %v1699, %v1748
    %v1755 = vadd.f32 %v1701, %v1749
    %v1756 = vadd.f32 %v1754, %v1752
    %v1757 = vadd.f32 %v1755, %v1753
    %v1758 = vrot.slane %v1756, 4
    %v1759 = vadd.f32 %v1756, %v1758
    %v1760 = vrot.slane %v1759, 2
    %v1761 = vadd.f32 %v1759, %v1760
    %v1762 = vrot.slane %v1761, 1
    %v1763 = vadd.f32 %v1761, %v1762
    %v1764 = vrot.slane %v1757, 4
    %v1765 = vadd.f32 %v1757, %v1764
    %v1766 = vrot.slane %v1765, 2
    %v1767 = vadd.f32 %v1765, %v1766
    %v1768 = vrot.slane %v1767, 1
    %v1769 = vadd.f32 %v1767, %v1768
    %v1770 = vmul.f32 %v1756, %v1756
    %v1771 = vmul.f32 %v1757, %v1757
    %v1772 = vrot.slane %v1770, 4
    %v1773 = vadd.f32 %v1770, %v1772
    %v1774 = vrot.slane %v1773, 2
    %v1775 = vadd.f32 %v1773, %v1774
    %v1776 = vrot.slane %v1775, 1
    %v1777 = vadd.f32 %v1775, %v1776
    %v1778 = vrot.slane %v1771, 4
    %v1779 = vadd.f32 %v1771, %v1778
    %v1780 = vrot.slane %v1779, 2
    %v1781 = vadd.f32 %v1779, %v1780
    %v1782 = vrot.slane %v1781, 1
    %v1783 = vadd.f32 %v1781, %v1782
    %v1784 = vsel %vm884, %v1763, %v1777
    %v1785 = vsel %vm884, %v1769, %v1783
    %1786 = vmatprep.subr.mxu0 %v90
    %1787 = vmatpush1.msra.mxu0 %v89
    %1788 = vmatprep.subr.mxu0 %v88
    %1789 = vmatpush1.msra.mxu0 %v87
    %1790 = vmatprep.subr.mxu0 %v86
    %1791 = vmatpush1.msra.mxu0 %v85
    %1792 = vmatprep.subr.mxu0 %v84
    %1793 = vmatpush1.msra.mxu0 %v83
    %1794 = vmatprep.subr.mxu0 %v82
    %1795 = vmatpush1.msra.mxu0 %v81
    %1796 = vmatprep.subr.mxu0 %v80
    %1797 = vmatpush1.msra.mxu0 %v79
    %1798 = vmatprep.subr.mxu0 %v78
    %1799 = vmatpush1.msra.mxu0 %v77
    %1800 = vmatprep.subr.mxu0 %v76
    %1801 = vmatpush1.msra.mxu0 %v75
    %1802 = vmatprep.subr.mxu0 %v74
    %1803 = vmatpush1.msra.mxu0 %v73
    %1804 = vmatprep.subr.mxu0 %v72
    %1805 = vmatpush1.msra.mxu0 %v71
    %1806 = vmatprep.subr.mxu0 %v70
    %1807 = vmatpush1.msra.mxu0 %v69
    %1808 = vmatprep.subr.mxu0 %v68
    %1809 = vmatpush1.msra.mxu0 %v67
    %1810 = vmatprep.subr.mxu0 %v66
    %1811 = vmatpush1.msra.mxu0 %v65
    %1812 = vmatprep.subr.mxu0 %v64
    %1813 = vmatpush1.msra.mxu0 %v63
    %1814 = vmatprep.subr.mxu0 %v62
    %1815 = vmatpush1.msra.mxu0 %v61
    %1816 = vmatprep.subr.mxu0 %v60
    %1817 = vmatpush1.msra.mxu0 %v59
    %1818 = vmatprep.subr.mxu0 %v122
    %1819 = vmatpush2.msra.mxu0 %v121
    %1820 = vmatprep.subr.mxu0 %v120
    %1821 = vmatpush2.msra.mxu0 %v119
    %1822 = vmatprep.subr.mxu0 %v118
    %1823 = vmatpush2.msra.mxu0 %v117
    %1824 = vmatprep.subr.mxu0 %v116
    %1825 = vmatpush2.msra.mxu0 %v115
    %1826 = vmatprep.subr.mxu0 %v114
    %1827 = vmatpush2.msra.mxu0 %v113
    %1828 = vmatprep.subr.mxu0 %v112
    %1829 = vmatpush2.msra.mxu0 %v111
    %1830 = vmatprep.subr.mxu0 %v110
    %1831 = vmatpush2.msra.mxu0 %v109
    %1832 = vmatprep.subr.mxu0 %v108
    %1833 = vmatpush2.msra.mxu0 %v107
    %1834 = vmatprep.subr.mxu0 %v106
    %1835 = vmatpush2.msra.mxu0 %v105
    %1836 = vmatprep.subr.mxu0 %v104
    %1837 = vmatpush2.msra.mxu0 %v103
    %1838 = vmatprep.subr.mxu0 %v102
    %1839 = vmatpush2.msra.mxu0 %v101
    %1840 = vmatprep.subr.mxu0 %v100
    %1841 = vmatpush2.msra.mxu0 %v99
    %1842 = vmatprep.subr.mxu0 %v98
    %1843 = vmatpush2.msra.mxu0 %v97
    %1844 = vmatprep.subr.mxu0 %v96
    %1845 = vmatpush2.msra.mxu0 %v95
    %1846 = vmatprep.subr.mxu0 %v94
    %1847 = vmatpush2.msra.mxu0 %v93
    %1848 = vmatprep.subr.mxu0 %v92
    %1849 = vmatpush2.msra.mxu0 %v91
    %1850 = vmatprep.mubr.f32.mxu0 %v1785
    %1851 = vmatmul.mubr.f32.gmra.mxu0 %v1784
    %v1852 = vpop.f32.mrf.mxu0
    %v1853 = vadd.f32 0.0, %v1852
    %v1854 = vpop.f32.mrf.mxu0
    %v1855 = vadd.f32 0.0, %v1854
    %1856 = vdwg.mxu0
    %v1857 = vmul.f32 %v1853, 0.001953125
    %v1858 = vmul.f32 %v1855, 0.001953125
    %v1859 = vmul.f32 %v1857, %v1857
    %v1860 = vmul.f32 %v1858, %v1858
    %v1863 = vrot.slane %v1859, 7
    %v1864 = vrot.slane %v1860, 7
    %v1867 = vsub.f32 %v1857, %v1863
    %v1868 = vsub.f32 %v1858, %v1864
    %v1869 = vld [vmem:[%s5] sm:$0x3]
    %v1870 = vadd.f32 %v1867, 1e-05
    %v1871 = vadd.f32 %v1868, 1e-05
    %v1872 = vrsqrt.pop %v1870
    %v1873 = vrsqrt.pop %v1871
    %v1876 = vcombine.low %v1872, %v1873
    %v1878 = vunpack.c.l.s4 1966171168
    %v1879 = vunpack.c.0.s8 %v1878
    %v1880 = vlaneseq
    %v1881 = vshrl.u32 %v1880, 7
    %v1882 = vsub.s32 %v1879, %v1881
    %v1883 = vrot.slane %v1876, %v1882
    %v1884 = vcombine.high %v1883, %v1883
    %v1886 = vunpack.c.l.s4 1966171168
    %v1887 = vunpack.c.0.s8 %v1886
    %v1888 = vlaneseq
    %v1889 = vshrl.u32 %v1888, 7
    %v1890 = vsub.s32 %v1887, %v1889
    %v1891 = vrot.slane %v1884, %v1890
    %v1893 = vmul.f32 %v1869, %v1891
    %v1894 = vld [vmem:[%s6] sm:$0x3]
    %v1896 = vlaneseq
    %v1897 = vshrl.u32 %v1896, 7
    %v1898 = vsub.s32 0, %v1897
    %v1899 = vrot.slane %v1893, %v1898
    %v1900 = vlaneseq
    %v1901 = vshrl.u32 %v1900, 7
    %v1902 = vsub.s32 1, %v1901
    %v1903 = vrot.slane %v1893, %v1902
    %v1906 = vmul.f32 %v1857, %v1899
    %v1907 = vmul.f32 %v1858, %v1903
    %v1910 = vcombine.low %v1906, %v1907
    %v1912 = vunpack.c.l.s4 1966171168
    %v1913 = vunpack.c.0.s8 %v1912
    %v1914 = vlaneseq
    %v1915 = vshrl.u32 %v1914, 7
    %v1916 = vsub.s32 %v1913, %v1915
    %v1917 = vrot.slane %v1910, %v1916
    %v1919 = vunpack.c.l.s4 1966171168
    %v1920 = vunpack.c.0.s8 %v1919
    %v1921 = vlaneseq
    %v1922 = vshrl.u32 %v1921, 7
    %v1923 = vsub.s32 %v1920, %v1922
    %v1924 = vrot.slane %v1917, %v1923
    %v1926 = vsub.f32 %v1894, %v1924
    %v1927 = vmul.f32 %v1756, %v1899
    %v1928 = vmul.f32 %v1757, %v1903
    %v1930 = vlaneseq
    %v1931 = vshrl.u32 %v1930, 7
    %v1932 = vsub.s32 0, %v1931
    %v1933 = vrot.slane %v1926, %v1932
    %v1934 = vlaneseq
    %v1935 = vshrl.u32 %v1934, 7
    %v1936 = vsub.s32 1, %v1935
    %v1937 = vrot.slane %v1926, %v1936
    %v1940 = vadd.f32 %v1927, %v1933
    %v1941 = vadd.f32 %v1928, %v1937
    %v1942 = vadd.f32 %v1940, %v141
    %v1943 = vadd.f32 %v1941, %v142
    %v1946 = vcombine.low %v1942, %v1943
    %v1947 = vcombine.high %v1942, %v1943
    %1950 = vst [vmem:[%s8] sm:$0xff] %v1946
    %1951 = vst [vmem:[%s8 + $0x8] sm:$0xff] %v1947
    // Predicated region
    $region42: #{residual_block_forward.1} parent=1 // pred_check
      _
    $region43: #{residual_block_forward.1} parent=1 // pred_check_branch
      %1953 = sbr.rel (0) target = $region45
    $region44: #{residual_block_forward.1} parent=1 // pred_region
      _
    $region45: #{residual_block_forward.1} parent=1 // pred_fallthru
      _
    // Predicated region
    $region46: #{residual_block_forward.1} parent=1 // pred_check
      _
    $region47: #{residual_block_forward.1} parent=1 // pred_check_branch
      %1955 = sbr.rel (0) target = $region49
    $region48: #{residual_block_forward.1} parent=1 // pred_region
      _
    $region49: #{residual_block_forward.1} parent=1 // pred_fallthru
      _
    %1956 = vsyncpa [#allocation3], 1
    %1957 = vsyncpa [#allocation5], 1

</llo_original>
